<compile_context>
chip_gen: v7x
topology: tpu7x:2x2x1
jax: 0.10.0
libtpu: 0.0.40
codegen_flags: <defaults>
</compile_context>

<pallas_src>
import jax
import jax.numpy as jnp
from jax import lax
from jax.experimental import pallas as pl
from jax.experimental.pallas import tpu as pltpu


# ---------------------------------------------------------------------------
# helpers
# ---------------------------------------------------------------------------
def _largest_divisor_not_exceeding(n, cap):
    cap = int(max(1, min(n, cap)))
    for d in range(cap, 0, -1):
        if n % d == 0:
            return d
    return 1


def _vmem_limit(bytes_est):
    # generous headroom, clamped to a value that is safe on v5e/v6e/v7x.
    return int(min(64 << 20, max(32 << 20, int(1.5 * bytes_est) + (4 << 20))))


# ---------------------------------------------------------------------------
# Kernel 1: fused conv3x3 (parity-split columns, kw packed along K) + per-step
# partial BN statistics.  Grid = (N, H // th1), both axes "parallel".
# ---------------------------------------------------------------------------
def conv_stats_kernel(xe_ref, xo_ref, w_ref, oe_ref, oo_ref, stats_ref):
    # xe/xo  : (H+2, Wp8, Cin)  bf16  whole padded image (even/odd input columns),
    #          VMEM-resident across the row-tile grid axis.
    # w_ref  : (3, 3*Cin, Cout) bf16  kh-major weights, kw packed along K.
    # oe/oo  : (th1, Wout, Cout) bf16 conv rows [t*th1, (t+1)*th1) at even/odd cols.
    # stats  : (8, Cout) f32   row 0 = per-step channel sum, row 1 = sum of squares.
    th1, Wout, Cout = oe_ref.shape
    cin3 = w_ref.shape[1]
    t = pl.program_id(1)
    row0 = t * th1

    xe_t = xe_ref[pl.ds(row0, th1 + 2)]          # (th1+2, Wp8, Cin)
    xo_t = xo_ref[pl.ds(row0, th1 + 2)]

    # Column taps: "u" = plane cols [0, Wout), "s" = plane cols [1, Wout+1).
    # Built once per step (not once per tap).
    e_u = xe_t[:, :Wout, :]
    o_u = xo_t[:, :Wout, :]
    e_s = xe_t[:, 1:1 + Wout, :]
    o_s = xo_t[:, 1:1 + Wout, :]

    rows = (th1 + 2) * Wout

    def run_parity(slots, out_ref):
        # Pack the 3 kw taps along K (K = 3*Cin): each kh is one fat matmul and
        # every lhs is an 8-aligned leading-dim slice (Wout % 8 == 0) -> no
        # per-tap relayout.  Successive dots chain into one f32 accumulator.
        pack = jnp.concatenate(slots, axis=-1).reshape(rows, cin3)
        acc = jnp.zeros((th1 * Wout, Cout), jnp.float32)
        for kh in range(3):
            lhs = pack[kh * Wout: kh * Wout + th1 * Wout, :]
            acc = acc + jnp.dot(lhs, w_ref[kh], preferred_element_type=jnp.float32)
        out_ref[...] = acc.reshape(th1, Wout, Cout).astype(out_ref.dtype)
        s = jnp.sum(acc, axis=0, keepdims=True)
        sq = jnp.sum(acc * acc, axis=0, keepdims=True)
        return s, sq

    # Parity 0 fully finished (stored + reduced) before parity 1 starts, so only
    # one f32 accumulator is live at a time.
    s0, sq0 = run_parity([e_u, o_u, e_s], oe_ref)      # even output columns
    s1, sq1 = run_parity([o_u, e_s, o_s], oo_ref)      # odd output columns

    stats_ref[...] = jnp.concatenate(
        [s0 + s1, sq0 + sq1, jnp.zeros((6, Cout), jnp.float32)], axis=0)


# ---------------------------------------------------------------------------
# Kernel 2: fused BatchNorm(affine) + ReLU + 2x2 average pool.
# Reads bf16 conv intermediates; the 1/4 pool factor is folded through the ReLU
# into scale/shift (relu(y)/4 == relu(y/4)).  Only leading-dim reshapes/adds.
# ---------------------------------------------------------------------------
def bn_relu_pool_kernel(ce_ref, co_ref, scale_ref, shift_ref, o_ref):
    th, Wout, Cout = o_ref.shape
    scale = scale_ref[...]                               # (1, Cout) f32 (incl. 0.25)
    shift = shift_ref[...]
    ve = jnp.maximum(ce_ref[...].astype(jnp.float32) * scale + shift, 0.0)
    vo = jnp.maximum(co_ref[...].astype(jnp.float32) * scale + shift, 0.0)
    ve = ve.reshape(th, 2, Wout, Cout)                   # split row pairs (leading dims)
    vo = vo.reshape(th, 2, Wout, Cout)
    o_ref[...] = (ve[:, 0] + ve[:, 1] + vo[:, 0] + vo[:, 1]).astype(o_ref.dtype)


# ---------------------------------------------------------------------------
# Wrapper
# ---------------------------------------------------------------------------
def down_block2d(x, w, b, gamma, beta, *, eps=1e-5):
    """x: (N, Cin, H, W) f32 NCHW.  Returns (N, Cout, H//2, W//2) f32 NCHW."""
    N, Cin, H, W = x.shape
    Cout = w.shape[0]
    assert w.shape == (Cout, Cin, 3, 3), "kernel_size=3, groups=1 only"
    assert H % 2 == 0 and W % 16 == 0, "need H even and W//2 a multiple of 8"
    Hout, Wout = H // 2, W // 2
    Wp = Wout + 1
    Wp8 = ((Wp + 7) // 8) * 8                       # plane width, 8-sublane aligned
    M = N * H * W

    # --- row-tile sizes from a VMEM byte budget (double-buffered blocks) ---
    per_row1 = Wout * (16 * Cout + 20 * Cin)        # kernel-1 th1-scaled bytes / row
    th1 = _largest_divisor_not_exceeding(H, (10 << 20) // max(per_row1, 1))
    n_t = H // th1
    per_row2 = 40 * Wout * Cout                     # kernel-2 th2-scaled bytes / row
    th2 = _largest_divisor_not_exceeding(Hout, (10 << 20) // max(per_row2, 1))

    # --- XLA glue (bf16 BEFORE transpose / pad / parity split) ---
    x_bf = x.astype(jnp.bfloat16)
    x_nhwc = jnp.transpose(x_bf, (0, 2, 3, 1))                        # (N, H, W, Cin)
    x_pad = jnp.pad(x_nhwc, ((0, 0), (1, 1), (1, 1 + 2 * (Wp8 - Wp)), (0, 0)))
    xe = x_pad[:, :, 0::2, :]                                         # (N, H+2, Wp8, Cin)
    xo = x_pad[:, :, 1::2, :]

    # (Cout, Cin, 3, 3) -> (kh, kw*Cin, Cout): kw packed along K.
    w_packed = jnp.transpose(w, (2, 3, 1, 0)).reshape(3, 3 * Cin, Cout)
    w_packed = w_packed.astype(jnp.bfloat16)

    # Conv bias is a per-channel constant -> exactly cancelled by train-mode BN.
    del b

    vmem1 = _vmem_limit(
        2 * (H + 2) * Wp8 * Cin * 2 * 2            # resident bf16 input planes, dbuf
        + 3 * 3 * Cin * Cout * 2 * 2               # resident weights, dbuf
        + 2 * th1 * Wout * Cout * 2 * 2            # bf16 conv outputs, dbuf
        + 2 * (th1 + 2) * Wout * 3 * Cin * 2       # packed lhs (bf16)
        + 4 * (th1 + 2) * Wout * Cin * 2           # tap views
        + 2 * th1 * Wout * Cout * 4)               # f32 accumulators

    conv_e, conv_o, stats = pl.pallas_call(
        conv_stats_kernel,
        out_shape=(
            jax.ShapeDtypeStruct((N, H, Wout, Cout), jnp.bfloat16),
            jax.ShapeDtypeStruct((N, H, Wout, Cout), jnp.bfloat16),
            jax.ShapeDtypeStruct((N, n_t, 8, Cout), jnp.float32),
        ),
        grid=(N, n_t),
        in_specs=[
            pl.BlockSpec((None, H + 2, Wp8, Cin), lambda n, t: (n, 0, 0, 0)),
            pl.BlockSpec((None, H + 2, Wp8, Cin), lambda n, t: (n, 0, 0, 0)),
            pl.BlockSpec((3, 3 * Cin, Cout), lambda n, t: (0, 0, 0)),
        ],
        out_specs=(
            pl.BlockSpec((None, th1, Wout, Cout), lambda n, t: (n, t, 0, 0)),
            pl.BlockSpec((None, th1, Wout, Cout), lambda n, t: (n, t, 0, 0)),
            pl.BlockSpec((None, None, 8, Cout), lambda n, t: (n, t, 0, 0)),
        ),
        compiler_params=pltpu.CompilerParams(
            dimension_semantics=("parallel", "parallel"),
            vmem_limit_bytes=vmem1),
    )(xe, xo, w_packed)

    # --- finalize BN batch statistics (tiny (N*n_t, Cout) f32 reduction) ---
    ch_sum = jnp.sum(stats[:, :, 0, :], axis=(0, 1))
    ch_sq = jnp.sum(stats[:, :, 1, :], axis=(0, 1))
    mean = ch_sum / M
    var = jnp.maximum(ch_sq / M - mean * mean, 0.0)      # biased var (PyTorch fwd)
    # TODO(synk): E[x^2]-mean^2 can cancel for very large M; a Welford-style
    # per-tile (mean, M2) combine would be more robust.
    # TODO(synk): running_mean / running_var buffer updates (stateful) not modeled.
    scale = gamma * lax.rsqrt(var + eps)
    shift = beta - mean * scale
    scale_p = (0.25 * scale).reshape(1, Cout).astype(jnp.float32)   # fold pool 1/4
    shift_p = (0.25 * shift).reshape(1, Cout).astype(jnp.float32)

    vmem2 = _vmem_limit(
        2 * 2 * th2 * Wout * Cout * 2 * 2          # bf16 conv inputs, dbuf
        + 2 * 2 * th2 * Wout * Cout * 4            # f32 upcast temporaries
        + th2 * Wout * Cout * 4 * 2                # f32 output, dbuf
        + 2 * Cout * 4 * 2)

    pooled = pl.pallas_call(
        bn_relu_pool_kernel,
        out_shape=jax.ShapeDtypeStruct((N, Hout, Wout, Cout), jnp.float32),
        grid=(N, Hout // th2),
        in_specs=[
            pl.BlockSpec((None, 2 * th2, Wout, Cout), lambda n, t: (n, t, 0, 0)),
            pl.BlockSpec((None, 2 * th2, Wout, Cout), lambda n, t: (n, t, 0, 0)),
            pl.BlockSpec((1, Cout), lambda n, t: (0, 0)),
            pl.BlockSpec((1, Cout), lambda n, t: (0, 0)),
        ],
        out_specs=pl.BlockSpec((None, th2, Wout, Cout), lambda n, t: (n, t, 0, 0)),
        compiler_params=pltpu.CompilerParams(
            dimension_semantics=("parallel", "parallel"),
            vmem_limit_bytes=vmem2),
    )(conv_e, conv_o, scale_p, shift_p)

    # NCHW to match the PyTorch module (relayout only on the 4x-smaller pooled
    # tensor; keep NHWC downstream to drop this transpose entirely).
    return jnp.transpose(pooled, (0, 3, 1, 2))


# ---------------------------------------------------------------------------
# Pure-JAX reference (PyTorch-equivalent forward, exact f32)
# ---------------------------------------------------------------------------
def reference(x, w, b, gamma, beta, eps=1e-5):
    conv = lax.conv_general_dilated(
        x, w, window_strides=(1, 1), padding=((1, 1), (1, 1)),
        dimension_numbers=("NCHW", "OIHW", "NCHW"),
        precision=lax.Precision.HIGHEST)
    conv = conv + b.reshape(1, -1, 1, 1)
    mean = conv.mean(axis=(0, 2, 3), keepdims=True)
    var = ((conv - mean) ** 2).mean(axis=(0, 2, 3), keepdims=True)
    normed = (conv - mean) / jnp.sqrt(var + eps)
    normed = normed * gamma.reshape(1, -1, 1, 1) + beta.reshape(1, -1, 1, 1)
    r = jnp.maximum(normed, 0.0)
    n, c, h, ww = r.shape
    return r.reshape(n, c, h // 2, 2, ww // 2, 2).mean(axis=(3, 5))


if __name__ == "__main__":
    key = jax.random.PRNGKey(0)
    k1, k2, k3, k4, k5 = jax.random.split(key, 5)

    N, Cin, H, W = 2, 4, 16, 16
    Cout = 8

    x = jax.random.normal(k1, (N, Cin, H, W), jnp.float32)
    w = jax.random.normal(k2, (Cout, Cin, 3, 3), jnp.float32) * 0.1
    b = jax.random.normal(k3, (Cout,), jnp.float32) * 0.1
    gamma = 1.0 + 0.1 * jax.random.normal(k4, (Cout,), jnp.float32)
    beta = 0.1 * jax.random.normal(k5, (Cout,), jnp.float32)

    out = jax.block_until_ready(down_block2d(x, w, b, gamma, beta))
    assert out.shape == (N, Cout, H // 2, W // 2), out.shape

    # Tolerance accounts only for bf16 MXU operands and the bf16 conv intermediate.
    ref_f32 = reference(x, w, b, gamma, beta)
    max_err = float(jnp.max(jnp.abs(out - ref_f32)))
    assert jnp.allclose(out, ref_f32, atol=5e-2, rtol=5e-2), max_err

    print("KERNEL_OK")
</pallas_src>

<mosaic_0001>
module attributes {stable_mosaic.version = 11 : i64} {
  func.func @conv_stats_kernel(%arg0: i32, %arg1: i32, %arg2: memref<1x18x16x4xbf16, #tpu.memory_space<vmem>>, %arg3: memref<1x18x16x4xbf16, #tpu.memory_space<vmem>>, %arg4: memref<3x12x8xbf16, #tpu.memory_space<vmem>>, %arg5: memref<1x16x8x8xbf16, #tpu.memory_space<vmem>>, %arg6: memref<1x16x8x8xbf16, #tpu.memory_space<vmem>>, %arg7: memref<1x1x8x8xf32, #tpu.memory_space<vmem>>) attributes {dimension_semantics = [#tpu.dimension_semantics<parallel>, #tpu.dimension_semantics<parallel>], iteration_bounds = array<i64: 2, 1>, scalar_prefetch = 0 : i64, scratch_operands = 0 : i64, tpu.core_type = #tpu.core_type<tc>, window_params = [{transform_indices = @transform_0, window_bounds = array<i64: 1, 18, 16, 4>}, {transform_indices = @transform_1, window_bounds = array<i64: 1, 18, 16, 4>}, {pipeline_mode = #tpu.pipeline_mode<synchronous>, transform_indices = @transform_2, window_bounds = array<i64: 3, 12, 8>}, {transform_indices = @transform_3, window_bounds = array<i64: 1, 16, 8, 8>}, {transform_indices = @transform_4, window_bounds = array<i64: 1, 16, 8, 8>}, {transform_indices = @transform_5, window_bounds = array<i64: 1, 1, 8, 8>}]} {
    %c16_i32 = arith.constant 16 : i32
    %0 = arith.muli %arg1, %c16_i32 : i32
    %c0 = arith.constant 0 : index
    %1 = arith.index_cast %0 : i32 to index
    %c0_0 = arith.constant 0 : index
    %c0_1 = arith.constant 0 : index
    %2 = vector.load %arg2[%c0, %1, %c0_0, %c0_1] : memref<1x18x16x4xbf16, #tpu.memory_space<vmem>>, vector<1x18x16x4xbf16>
    %3 = vector.shape_cast %2 : vector<1x18x16x4xbf16> to vector<18x16x4xbf16>
    %c0_2 = arith.constant 0 : index
    %4 = arith.index_cast %0 : i32 to index
    %c0_3 = arith.constant 0 : index
    %c0_4 = arith.constant 0 : index
    %5 = vector.load %arg3[%c0_2, %4, %c0_3, %c0_4] : memref<1x18x16x4xbf16, #tpu.memory_space<vmem>>, vector<1x18x16x4xbf16>
    %6 = vector.shape_cast %5 : vector<1x18x16x4xbf16> to vector<18x16x4xbf16>
    %7 = vector.extract_strided_slice %3 {offsets = [0, 0, 0], sizes = [18, 8, 4], strides = [1, 1, 1]} : vector<18x16x4xbf16> to vector<18x8x4xbf16>
    %8 = vector.extract_strided_slice %6 {offsets = [0, 0, 0], sizes = [18, 8, 4], strides = [1, 1, 1]} : vector<18x16x4xbf16> to vector<18x8x4xbf16>
    %9 = vector.extract_strided_slice %3 {offsets = [0, 1, 0], sizes = [18, 8, 4], strides = [1, 1, 1]} : vector<18x16x4xbf16> to vector<18x8x4xbf16>
    %10 = vector.extract_strided_slice %6 {offsets = [0, 1, 0], sizes = [18, 8, 4], strides = [1, 1, 1]} : vector<18x16x4xbf16> to vector<18x8x4xbf16>
    %11 = tpu.concatenate %7, %8, %9 in 2 : vector<18x8x4xbf16>, vector<18x8x4xbf16>, vector<18x8x4xbf16> -> vector<18x8x12xbf16>
    %12 = vector.shape_cast %11 : vector<18x8x12xbf16> to vector<144x12xbf16>
    %cst = arith.constant 0.000000e+00 : f32
    %13 = vector.broadcast %cst : f32 to vector<128x8xf32>
    %14 = vector.extract_strided_slice %12 {offsets = [0, 0], sizes = [128, 12], strides = [1, 1]} : vector<144x12xbf16> to vector<128x12xbf16>
    %c0_5 = arith.constant 0 : index
    %c0_6 = arith.constant 0 : index
    %c0_7 = arith.constant 0 : index
    %15 = vector.load %arg4[%c0_5, %c0_6, %c0_7] : memref<3x12x8xbf16, #tpu.memory_space<vmem>>, vector<1x12x8xbf16>
    %16 = vector.shape_cast %15 : vector<1x12x8xbf16> to vector<12x8xbf16>
    %cst_8 = arith.constant dense<0.000000e+00> : vector<128x8xf32>
    %17 = tpu.matmul %14, %16, %cst_8 {dimension_numbers = #tpu.dot_dimension_numbers<[1], [0], [0], [1], [0, 0, 1, 1], [], []>} : vector<128x12xbf16>, vector<12x8xbf16>, vector<128x8xf32> -> vector<128x8xf32>
    %18 = arith.addf %13, %17 : vector<128x8xf32>
    %19 = vector.extract_strided_slice %12 {offsets = [8, 0], sizes = [128, 12], strides = [1, 1]} : vector<144x12xbf16> to vector<128x12xbf16>
    %c1 = arith.constant 1 : index
    %c0_9 = arith.constant 0 : index
    %c0_10 = arith.constant 0 : index
    %20 = vector.load %arg4[%c1, %c0_9, %c0_10] : memref<3x12x8xbf16, #tpu.memory_space<vmem>>, vector<1x12x8xbf16>
    %21 = vector.shape_cast %20 : vector<1x12x8xbf16> to vector<12x8xbf16>
    %cst_11 = arith.constant dense<0.000000e+00> : vector<128x8xf32>
    %22 = tpu.matmul %19, %21, %cst_11 {dimension_numbers = #tpu.dot_dimension_numbers<[1], [0], [0], [1], [0, 0, 1, 1], [], []>} : vector<128x12xbf16>, vector<12x8xbf16>, vector<128x8xf32> -> vector<128x8xf32>
    %23 = arith.addf %18, %22 : vector<128x8xf32>
    %24 = vector.extract_strided_slice %12 {offsets = [16, 0], sizes = [128, 12], strides = [1, 1]} : vector<144x12xbf16> to vector<128x12xbf16>
    %c2 = arith.constant 2 : index
    %c0_12 = arith.constant 0 : index
    %c0_13 = arith.constant 0 : index
    %25 = vector.load %arg4[%c2, %c0_12, %c0_13] : memref<3x12x8xbf16, #tpu.memory_space<vmem>>, vector<1x12x8xbf16>
    %26 = vector.shape_cast %25 : vector<1x12x8xbf16> to vector<12x8xbf16>
    %cst_14 = arith.constant dense<0.000000e+00> : vector<128x8xf32>
    %27 = tpu.matmul %24, %26, %cst_14 {dimension_numbers = #tpu.dot_dimension_numbers<[1], [0], [0], [1], [0, 0, 1, 1], [], []>} : vector<128x12xbf16>, vector<12x8xbf16>, vector<128x8xf32> -> vector<128x8xf32>
    %28 = arith.addf %23, %27 : vector<128x8xf32>
    %29 = vector.shape_cast %28 : vector<128x8xf32> to vector<16x8x8xf32>
    %30 = arith.truncf %29 : vector<16x8x8xf32> to vector<16x8x8xbf16>
    %c0_15 = arith.constant 0 : index
    %c0_16 = arith.constant 0 : index
    %c0_17 = arith.constant 0 : index
    %c0_18 = arith.constant 0 : index
    %31 = vector.load %arg5[%c0_15, %c0_16, %c0_17, %c0_18] : memref<1x16x8x8xbf16, #tpu.memory_space<vmem>>, vector<1x16x8x8xbf16>
    %32 = vector.shape_cast %31 : vector<1x16x8x8xbf16> to vector<16x8x8xbf16>
    %33 = vector.shape_cast %30 : vector<16x8x8xbf16> to vector<1x16x8x8xbf16>
    tpu.vector_store %arg5[%c0_15, %c0_16, %c0_17, %c0_18], %33 {strides = array<i32>} : memref<1x16x8x8xbf16, #tpu.memory_space<vmem>>, vector<1x16x8x8xbf16>,
    %cst_19 = arith.constant dense<0.000000e+00> : vector<8xf32>
    %34 = vector.multi_reduction <add>, %28, %cst_19 [0] : vector<128x8xf32> to vector<8xf32>
    %35 = vector.shape_cast %34 : vector<8xf32> to vector<1x8xf32>
    %36 = arith.mulf %28, %28 : vector<128x8xf32>
    %cst_20 = arith.constant dense<0.000000e+00> : vector<8xf32>
    %37 = vector.multi_reduction <add>, %36, %cst_20 [0] : vector<128x8xf32> to vector<8xf32>
    %38 = vector.shape_cast %37 : vector<8xf32> to vector<1x8xf32>
    %39 = tpu.concatenate %8, %9, %10 in 2 : vector<18x8x4xbf16>, vector<18x8x4xbf16>, vector<18x8x4xbf16> -> vector<18x8x12xbf16>
    %40 = vector.shape_cast %39 : vector<18x8x12xbf16> to vector<144x12xbf16>
    %cst_21 = arith.constant 0.000000e+00 : f32
    %41 = vector.broadcast %cst_21 : f32 to vector<128x8xf32>
    %42 = vector.extract_strided_slice %40 {offsets = [0, 0], sizes = [128, 12], strides = [1, 1]} : vector<144x12xbf16> to vector<128x12xbf16>
    %c0_22 = arith.constant 0 : index
    %c0_23 = arith.constant 0 : index
    %c0_24 = arith.constant 0 : index
    %43 = vector.load %arg4[%c0_22, %c0_23, %c0_24] : memref<3x12x8xbf16, #tpu.memory_space<vmem>>, vector<1x12x8xbf16>
    %44 = vector.shape_cast %43 : vector<1x12x8xbf16> to vector<12x8xbf16>
    %cst_25 = arith.constant dense<0.000000e+00> : vector<128x8xf32>
    %45 = tpu.matmul %42, %44, %cst_25 {dimension_numbers = #tpu.dot_dimension_numbers<[1], [0], [0], [1], [0, 0, 1, 1], [], []>} : vector<128x12xbf16>, vector<12x8xbf16>, vector<128x8xf32> -> vector<128x8xf32>
    %46 = arith.addf %41, %45 : vector<128x8xf32>
    %47 = vector.extract_strided_slice %40 {offsets = [8, 0], sizes = [128, 12], strides = [1, 1]} : vector<144x12xbf16> to vector<128x12xbf16>
    %c1_26 = arith.constant 1 : index
    %c0_27 = arith.constant 0 : index
    %c0_28 = arith.constant 0 : index
    %48 = vector.load %arg4[%c1_26, %c0_27, %c0_28] : memref<3x12x8xbf16, #tpu.memory_space<vmem>>, vector<1x12x8xbf16>
    %49 = vector.shape_cast %48 : vector<1x12x8xbf16> to vector<12x8xbf16>
    %cst_29 = arith.constant dense<0.000000e+00> : vector<128x8xf32>
    %50 = tpu.matmul %47, %49, %cst_29 {dimension_numbers = #tpu.dot_dimension_numbers<[1], [0], [0], [1], [0, 0, 1, 1], [], []>} : vector<128x12xbf16>, vector<12x8xbf16>, vector<128x8xf32> -> vector<128x8xf32>
    %51 = arith.addf %46, %50 : vector<128x8xf32>
    %52 = vector.extract_strided_slice %40 {offsets = [16, 0], sizes = [128, 12], strides = [1, 1]} : vector<144x12xbf16> to vector<128x12xbf16>
    %c2_30 = arith.constant 2 : index
    %c0_31 = arith.constant 0 : index
    %c0_32 = arith.constant 0 : index
    %53 = vector.load %arg4[%c2_30, %c0_31, %c0_32] : memref<3x12x8xbf16, #tpu.memory_space<vmem>>, vector<1x12x8xbf16>
    %54 = vector.shape_cast %53 : vector<1x12x8xbf16> to vector<12x8xbf16>
    %cst_33 = arith.constant dense<0.000000e+00> : vector<128x8xf32>
    %55 = tpu.matmul %52, %54, %cst_33 {dimension_numbers = #tpu.dot_dimension_numbers<[1], [0], [0], [1], [0, 0, 1, 1], [], []>} : vector<128x12xbf16>, vector<12x8xbf16>, vector<128x8xf32> -> vector<128x8xf32>
    %56 = arith.addf %51, %55 : vector<128x8xf32>
    %57 = vector.shape_cast %56 : vector<128x8xf32> to vector<16x8x8xf32>
    %58 = arith.truncf %57 : vector<16x8x8xf32> to vector<16x8x8xbf16>
    %c0_34 = arith.constant 0 : index
    %c0_35 = arith.constant 0 : index
    %c0_36 = arith.constant 0 : index
    %c0_37 = arith.constant 0 : index
    %59 = vector.load %arg6[%c0_34, %c0_35, %c0_36, %c0_37] : memref<1x16x8x8xbf16, #tpu.memory_space<vmem>>, vector<1x16x8x8xbf16>
    %60 = vector.shape_cast %59 : vector<1x16x8x8xbf16> to vector<16x8x8xbf16>
    %61 = vector.shape_cast %58 : vector<16x8x8xbf16> to vector<1x16x8x8xbf16>
    tpu.vector_store %arg6[%c0_34, %c0_35, %c0_36, %c0_37], %61 {strides = array<i32>} : memref<1x16x8x8xbf16, #tpu.memory_space<vmem>>, vector<1x16x8x8xbf16>,
    %cst_38 = arith.constant dense<0.000000e+00> : vector<8xf32>
    %62 = vector.multi_reduction <add>, %56, %cst_38 [0] : vector<128x8xf32> to vector<8xf32>
    %63 = vector.shape_cast %62 : vector<8xf32> to vector<1x8xf32>
    %64 = arith.mulf %56, %56 : vector<128x8xf32>
    %cst_39 = arith.constant dense<0.000000e+00> : vector<8xf32>
    %65 = vector.multi_reduction <add>, %64, %cst_39 [0] : vector<128x8xf32> to vector<8xf32>
    %66 = vector.shape_cast %65 : vector<8xf32> to vector<1x8xf32>
    %67 = arith.addf %35, %63 : vector<1x8xf32>
    %68 = arith.addf %38, %66 : vector<1x8xf32>
    %cst_40 = arith.constant 0.000000e+00 : f32
    %69 = vector.broadcast %cst_40 : f32 to vector<6x8xf32>
    %70 = tpu.concatenate %67, %68, %69 in 0 : vector<1x8xf32>, vector<1x8xf32>, vector<6x8xf32> -> vector<8x8xf32>
    %c0_41 = arith.constant 0 : index
    %c0_42 = arith.constant 0 : index
    %c0_43 = arith.constant 0 : index
    %c0_44 = arith.constant 0 : index
    %71 = vector.load %arg7[%c0_41, %c0_42, %c0_43, %c0_44] : memref<1x1x8x8xf32, #tpu.memory_space<vmem>>, vector<1x1x8x8xf32>
    %72 = vector.shape_cast %71 : vector<1x1x8x8xf32> to vector<8x8xf32>
    %73 = vector.shape_cast %70 : vector<8x8xf32> to vector<1x1x8x8xf32>
    tpu.vector_store %arg7[%c0_41, %c0_42, %c0_43, %c0_44], %73 {strides = array<i32>} : memref<1x1x8x8xf32, #tpu.memory_space<vmem>>, vector<1x1x8x8xf32>,
    return
  }
  func.func @transform_0(%arg0: i32, %arg1: i32) -> (i32, i32, i32, i32) {
    %c0_i32 = arith.constant 0 : i32
    %c0_i32_0 = arith.constant 0 : i32
    %c0_i32_1 = arith.constant 0 : i32
    %c0_i32_2 = arith.constant 0 : i32
    return %arg0, %c0_i32, %c0_i32_0, %c0_i32_1 : i32, i32, i32, i32
  }
  func.func @transform_1(%arg0: i32, %arg1: i32) -> (i32, i32, i32, i32) {
    %c0_i32 = arith.constant 0 : i32
    %c0_i32_0 = arith.constant 0 : i32
    %c0_i32_1 = arith.constant 0 : i32
    %c0_i32_2 = arith.constant 0 : i32
    return %arg0, %c0_i32, %c0_i32_0, %c0_i32_1 : i32, i32, i32, i32
  }
  func.func @transform_2(%arg0: i32, %arg1: i32) -> (i32, i32, i32) {
    %c0_i32 = arith.constant 0 : i32
    %c0_i32_0 = arith.constant 0 : i32
    %c0_i32_1 = arith.constant 0 : i32
    %c0_i32_2 = arith.constant 0 : i32
    return %c0_i32, %c0_i32_0, %c0_i32_1 : i32, i32, i32
  }
  func.func @transform_3(%arg0: i32, %arg1: i32) -> (i32, i32, i32, i32) {
    %c0_i32 = arith.constant 0 : i32
    %c0_i32_0 = arith.constant 0 : i32
    %c0_i32_1 = arith.constant 0 : i32
    return %arg0, %arg1, %c0_i32, %c0_i32_0 : i32, i32, i32, i32
  }
  func.func @transform_4(%arg0: i32, %arg1: i32) -> (i32, i32, i32, i32) {
    %c0_i32 = arith.constant 0 : i32
    %c0_i32_0 = arith.constant 0 : i32
    %c0_i32_1 = arith.constant 0 : i32
    return %arg0, %arg1, %c0_i32, %c0_i32_0 : i32, i32, i32, i32
  }
  func.func @transform_5(%arg0: i32, %arg1: i32) -> (i32, i32, i32, i32) {
    %c0_i32 = arith.constant 0 : i32
    %c0_i32_0 = arith.constant 0 : i32
    %c0_i32_1 = arith.constant 0 : i32
    return %arg0, %arg1, %c0_i32, %c0_i32_0 : i32, i32, i32, i32
  }
}

</mosaic_0001>

<llo_original>
// kernel: tpu_custom_call.1
$region0: #{tpu_custom_call.1}
  #allocation0 [shape = 'u32[]', space=smem, size = 0x4, offset = 0x4, fixed_abs, tag = 'smem constant byte address 0x4 - core index']
  #allocation1 [shape = 'u32[144,128]{1,0:T(1,128)}', space=vmem, size = 0x12000, scoped, tag = 'internal scratch']
  %s0 = inlined_call_operand.vmem [shape: bf16[2,18,16,4], index: 0, kind: input, shape index: {}]
  %s1 = inlined_call_operand.vmem [shape: bf16[2,18,16,4], index: 1, kind: input, shape index: {}]
  %s2 = inlined_call_operand.vmem [shape: bf16[3,12,8], index: 2, kind: input, shape index: {}]
  %s3 = inlined_call_operand.vmem [shape: bf16[2,16,8,8], index: 3, kind: output, shape index: {0}]
  %s4 = inlined_call_operand.vmem [shape: bf16[2,16,8,8], index: 4, kind: output, shape index: {1}]
  %s5 = inlined_call_operand.hbm [shape: f32[2,1,8,8], index: 5, kind: output, shape index: {2}]
  %6 = xla_tuple %s3, %s4, %s5
  %s7 = sld [smem:[#allocation0]]
  $region61: #{tpu_custom_call.1} parent=0
    _
  %s9 = ssub.s32 1, %s7
  %s10 = scalar_select 0, %s9, %s7
  $region1: #{tpu_custom_call.1} parent=0
    #allocation2 [shape = 'u8[8192]{0}', space=vmem, size = 0x2000, scoped, tag = 'output window, operand 2']
    #allocation3 [shape = 's32[2]{0}', space=sflag, size = 0x8, scoped, tag = 'scoped memory for tpu_custom_call.1']
    %11 = vsyncpa [#allocation3], 0
    %s12 = scalar_lea.sflag [#allocation3], 1
    %13 = vsyncpa %s12, 0
    loop: start=0, step=1, limit=4
    $region2: #{tpu_custom_call.1} parent=1 // loop_pre_header
      _
    $region3: #{tpu_custom_call.1} parent=1 // loop_header
      %s15 = sphi 0, %s19
      %p16 = scmp.ge.s32.totalorder %s15, 4
      %s22 = sphi 0, %s34
      %s23 = sphi 0, %s30
      %s24 = sphi 0, %s22
      %s25 = sphi 0, %s23
      %s26 = sphi 0, %s24
      %s27 = sphi 0, %s25
      %s37 = sphi 0, %s39
      %s40 = sphi 0, %s37
      %s41 = sphi 0, %s40
      %s57 = sphi 0, %s41
      %s63 = sphi 0, %s65
      %s66 = sphi 0, %s63
      %s67 = sphi 0, %s66
      %s83 = sphi 0, %s67
      %s87 = sphi 0, %s87
      %s89 = sphi 0, %s87
      %s90 = sphi 0, %s89
      %s104 = sphi 0, %s90
      %s112 = sphi 0, %s114
      %s115 = sphi 0, %s112
      %s116 = sphi 0, %s115
      %s132 = sphi 0, %s116
      %s140 = sphi 0, %s142
      %s143 = sphi 0, %s140
      %s144 = sphi 0, %s143
      %s160 = sphi 0, %s144
      %s168 = sphi 0, %s170
      %s171 = sphi 0, %s168
      %s172 = sphi 0, %s171
      %s188 = sphi 0, %s172
    $region4: #{tpu_custom_call.1} parent=1 // loop_header_branch
      %18 = sbr.rel (%p16) target = $region8
    $region5: #{tpu_custom_call.1} parent=1 // loop_body
      %s20 = ssub.s32 %s15, 1
      %s21 = ssub.s32 %s15, 2
      %s28 = sadd.s32 1, %s23
      %p29 = scmp.ge.s32.totalorder %s28, 1
      %s30 = scalar_select %p29, 0, %s28
      %s31 = sadd.s32 1, %s22
      %s32 = scalar_select %p29, %s31, %s22
      %p33 = scmp.ge.s32.totalorder %s32, 2
      %s34 = scalar_select %p33, 0, %s32
      %s35 = ssub.s32 %s22, %s34
      %p36 = scmp.eq.s32.totalorder %s35, 0
      %s38 = sadd.s32 %s37, 1
      %s39 = scalar_select %p36, %s37, %s38
      %p42 = pneg %p36
      %p43 = scmp.eq.s32.totalorder %s15, 1
      %p44 = por %p42, %p43
      %p45 = scmp.ne.s32.totalorder %s37, %s40
      %p46 = scmp.eq.s32.totalorder %s15, 0
      %p47 = por %p45, %p46
      %p48 = scmp.ne.s32.totalorder %s37, %s40
      %p49 = scmp.eq.s32.totalorder %s20, 1
      %p50 = por %p48, %p49
      %p51 = scmp.ne.s32.totalorder %s40, %s41
      %p52 = scmp.eq.s32.totalorder %s20, 0
      %p53 = por %p51, %p52
      %p54 = scmp.ne.s32.totalorder %s40, %s41
      %p55 = scmp.eq.s32.totalorder %s21, 1
      %p56 = por %p54, %p55
      %p58 = scmp.ne.s32.totalorder %s41, %s57
      %p59 = scmp.eq.s32.totalorder %s21, 0
      %p60 = por %p58, %p59
      %s61 = ssub.s32 %s22, %s34
      %p62 = scmp.eq.s32.totalorder %s61, 0
      %s64 = sadd.s32 %s63, 1
      %s65 = scalar_select %p62, %s63, %s64
      %p68 = pneg %p62
      %p69 = scmp.eq.s32.totalorder %s15, 1
      %p70 = por %p68, %p69
      %p71 = scmp.ne.s32.totalorder %s63, %s66
      %p72 = scmp.eq.s32.totalorder %s15, 0
      %p73 = por %p71, %p72
      %p74 = scmp.ne.s32.totalorder %s63, %s66
      %p75 = scmp.eq.s32.totalorder %s20, 1
      %p76 = por %p74, %p75
      %p77 = scmp.ne.s32.totalorder %s66, %s67
      %p78 = scmp.eq.s32.totalorder %s20, 0
      %p79 = por %p77, %p78
      %p80 = scmp.ne.s32.totalorder %s66, %s67
      %p81 = scmp.eq.s32.totalorder %s21, 1
      %p82 = por %p80, %p81
      %p84 = scmp.ne.s32.totalorder %s67, %s83
      %p85 = scmp.eq.s32.totalorder %s21, 0
      %p86 = por %p84, %p85
      %s88 = sadd.s32 %s87, 1
      %p91 = scmp.eq.s32.totalorder %s15, 1
      %p92 = scmp.ne.s32.totalorder %s87, %s89
      %p93 = scmp.eq.s32.totalorder %s15, 0
      %p94 = por %p92, %p93
      %p95 = scmp.ne.s32.totalorder %s87, %s89
      %p96 = scmp.eq.s32.totalorder %s20, 1
      %p97 = por %p95, %p96
      %p98 = scmp.ne.s32.totalorder %s89, %s90
      %p99 = scmp.eq.s32.totalorder %s20, 0
      %p100 = por %p98, %p99
      %p101 = scmp.ne.s32.totalorder %s89, %s90
      %p102 = scmp.eq.s32.totalorder %s21, 1
      %p103 = por %p101, %p102
      %p105 = scmp.ne.s32.totalorder %s90, %s104
      %p106 = scmp.eq.s32.totalorder %s21, 0
      %p107 = por %p105, %p106
      %s108 = ssub.s32 %s22, %s34
      %s109 = ssub.s32 %s23, %s30
      %s110 = sor.u32 %s108, %s109
      %p111 = scmp.eq.s32.totalorder %s110, 0
      %s113 = sadd.s32 %s112, 1
      %s114 = scalar_select %p111, %s112, %s113
      %p117 = pneg %p111
      %p118 = scmp.eq.s32.totalorder %s15, 1
      %p119 = por %p117, %p118
      %p120 = scmp.ne.s32.totalorder %s112, %s115
      %p121 = scmp.eq.s32.totalorder %s15, 0
      %p122 = por %p120, %p121
      %p123 = scmp.ne.s32.totalorder %s112, %s115
      %p124 = scmp.eq.s32.totalorder %s20, 1
      %p125 = por %p123, %p124
      %p126 = scmp.ne.s32.totalorder %s115, %s116
      %p127 = scmp.eq.s32.totalorder %s20, 0
      %p128 = por %p126, %p127
      %p129 = scmp.ne.s32.totalorder %s115, %s116
      %p130 = scmp.eq.s32.totalorder %s21, 1
      %p131 = por %p129, %p130
      %p133 = scmp.ne.s32.totalorder %s116, %s132
      %p134 = scmp.eq.s32.totalorder %s21, 0
      %p135 = por %p133, %p134
      %s136 = ssub.s32 %s22, %s34
      %s137 = ssub.s32 %s23, %s30
      %s138 = sor.u32 %s136, %s137
      %p139 = scmp.eq.s32.totalorder %s138, 0
      %s141 = sadd.s32 %s140, 1
      %s142 = scalar_select %p139, %s140, %s141
      %p145 = pneg %p139
      %p146 = scmp.eq.s32.totalorder %s15, 1
      %p147 = por %p145, %p146
      %p148 = scmp.ne.s32.totalorder %s140, %s143
      %p149 = scmp.eq.s32.totalorder %s15, 0
      %p150 = por %p148, %p149
      %p151 = scmp.ne.s32.totalorder %s140, %s143
      %p152 = scmp.eq.s32.totalorder %s20, 1
      %p153 = por %p151, %p152
      %p154 = scmp.ne.s32.totalorder %s143, %s144
      %p155 = scmp.eq.s32.totalorder %s20, 0
      %p156 = por %p154, %p155
      %p157 = scmp.ne.s32.totalorder %s143, %s144
      %p158 = scmp.eq.s32.totalorder %s21, 1
      %p159 = por %p157, %p158
      %p161 = scmp.ne.s32.totalorder %s144, %s160
      %p162 = scmp.eq.s32.totalorder %s21, 0
      %p163 = por %p161, %p162
      %s164 = ssub.s32 %s22, %s34
      %s165 = ssub.s32 %s23, %s30
      %s166 = sor.u32 %s164, %s165
      %p167 = scmp.eq.s32.totalorder %s166, 0
      %s169 = sadd.s32 %s168, 1
      %s170 = scalar_select %p167, %s168, %s169
      %p173 = pneg %p167
      %p174 = scmp.eq.s32.totalorder %s15, 1
      %p175 = por %p173, %p174
      %p176 = scmp.ne.s32.totalorder %s168, %s171
      %p177 = scmp.eq.s32.totalorder %s15, 0
      %p178 = por %p176, %p177
      %p179 = scmp.ne.s32.totalorder %s168, %s171
      %p180 = scmp.eq.s32.totalorder %s20, 1
      %p181 = por %p179, %p180
      %p182 = scmp.ne.s32.totalorder %s171, %s172
      %p183 = scmp.eq.s32.totalorder %s20, 0
      %p184 = por %p182, %p183
      %p185 = scmp.ne.s32.totalorder %s171, %s172
      %p186 = scmp.eq.s32.totalorder %s21, 1
      %p187 = por %p185, %p186
      %p189 = scmp.ne.s32.totalorder %s172, %s188
      %p190 = scmp.eq.s32.totalorder %s21, 0
      %p191 = por %p189, %p190
      %p192 = scmp.le.s32.totalorder 1, %s15
      %p193 = scmp.lt.s32.totalorder %s15, 3
      %p194 = pnand %p192, %p193
      %p195 = pneg %p194
      // Predicated region
      $region9: #{tpu_custom_call.1} parent=5 // pred_check
        _
      $region10: #{tpu_custom_call.1} parent=5 // pred_check_branch
        %197 = sbr.rel (%p194) target = $region12
      $region11: #{tpu_custom_call.1} parent=5 // pred_region
        %s198 = ssub.s32 %s15, 1
        // Predicated region
        $region13: #{tpu_custom_call.1} parent=11 // pred_check
          %p199 = pneg %p100
        $region14: #{tpu_custom_call.1} parent=11 // pred_check_branch
          %201 = sbr.rel (%p199) target = $region16
        $region15: #{tpu_custom_call.1} parent=11 // pred_region
          _
        $region16: #{tpu_custom_call.1} parent=11 // pred_fallthru
          _
      $region12: #{tpu_custom_call.1} parent=5 // pred_fallthru
        _
      %p202 = scmp.lt.s32.totalorder %s15, 2
      // Predicated region
      $region17: #{tpu_custom_call.1} parent=5 // pred_check
        %p203 = pneg %p202
      $region18: #{tpu_custom_call.1} parent=5 // pred_check_branch
        %205 = sbr.rel (%p203) target = $region20
      $region19: #{tpu_custom_call.1} parent=5 // pred_region
        // Predicated region
        $region21: #{tpu_custom_call.1} parent=19 // pred_check
          %p206 = pneg %p47
        $region22: #{tpu_custom_call.1} parent=19 // pred_check_branch
          %208 = sbr.rel (%p206) target = $region24
        $region23: #{tpu_custom_call.1} parent=19 // pred_region
          %p209 = scmp.lt.s32.totalorder %s22, 1
          %s210 = scalar_select %p209, %s22, 1
          %s211 = smul.addr %s210, 36
          %s212 = smul.addr %s211, 4
          %s213 = scalar_lea.vmem %s0, %s212
        $region24: #{tpu_custom_call.1} parent=19 // pred_fallthru
          _
        // Predicated region
        $region25: #{tpu_custom_call.1} parent=19 // pred_check
          %p214 = pneg %p73
        $region26: #{tpu_custom_call.1} parent=19 // pred_check_branch
          %216 = sbr.rel (%p214) target = $region28
        $region27: #{tpu_custom_call.1} parent=19 // pred_region
          %p217 = scmp.lt.s32.totalorder %s22, 1
          %s218 = scalar_select %p217, %s22, 1
          %s219 = smul.addr %s218, 36
          %s220 = smul.addr %s219, 4
          %s221 = scalar_lea.vmem %s1, %s220
        $region28: #{tpu_custom_call.1} parent=19 // pred_fallthru
          _
      $region20: #{tpu_custom_call.1} parent=5 // pred_fallthru
        _
      %p222 = scmp.le.s32.totalorder 1, %s15
      %p223 = scmp.lt.s32.totalorder %s15, 3
      %p224 = pnand %p222, %p223
      %p225 = pneg %p224
      // Predicated region
      $region29: #{tpu_custom_call.1} parent=5 // pred_check
        _
      $region30: #{tpu_custom_call.1} parent=5 // pred_check_branch
        %227 = sbr.rel (%p224) target = $region32
      $region31: #{tpu_custom_call.1} parent=5 // pred_region
        %s228 = ssub.s32 %s15, 1
        %p229 = scmp.lt.s32.totalorder %s24, 1
        %s230 = scalar_select %p229, %s24, 1
        %s231 = smul.addr %s230, 36
        %s232 = smul.addr %s231, 4
        %s233 = scalar_lea.vmem %s0, %s232
        %p234 = pneg %p53
        %p235 = pneg %p50
        %p236 = scmp.lt.s32.totalorder %s24, 1
        %s237 = scalar_select %p236, %s24, 1
        %s238 = smul.addr %s237, 36
        %s239 = smul.addr %s238, 4
        %s240 = scalar_lea.vmem %s1, %s239
        %p241 = pneg %p79
        %p242 = pneg %p76
        %p243 = pneg %p100
        %p244 = pneg %p97
        %p245 = pneg %p128
        %p246 = pneg %p125
        %s247 = smul.u32 16, %s25
        %p248 = scmp.lt.s32.totalorder %s24, 1
        %s249 = scalar_select %p248, %s24, 1
        %p250 = scmp.lt.s32.totalorder %s247, 15
        %s251 = scalar_select %p250, %s247, 15
        %s252 = smul.addr %s249, 16
        %s253 = sadd.s32 %s251, %s252
        %s254 = smul.addr %s253, 4
        %s255 = scalar_lea.vmem %s3, %s254
        %p256 = pneg %p156
        %p257 = pneg %p153
        %s258 = smul.u32 16, %s25
        %p259 = scmp.lt.s32.totalorder %s24, 1
        %s260 = scalar_select %p259, %s24, 1
        %p261 = scmp.lt.s32.totalorder %s258, 15
        %s262 = scalar_select %p261, %s258, 15
        %s263 = smul.addr %s260, 16
        %s264 = sadd.s32 %s262, %s263
        %s265 = smul.addr %s264, 4
        %s266 = scalar_lea.vmem %s4, %s265
        %p267 = pneg %p184
        %p268 = pneg %p181
        %s269 = sand.u32 %s171, 1
        %s270 = scalar_lea.sflag [#allocation3], %s269
        %s271 = sand.u32 %s171, 1
        %s272 = smul.addr %s271, 8
        %s273 = scalar_lea.vmem [#allocation2], %s272
        %p274 = scmp.lt.s32.totalorder %s24, 1
        %s275 = scalar_select %p274, %s24, 1
        %s276 = smul.addr %s275, 36
        %s277 = smul.addr %s276, 4
        %s278 = scalar_lea.vmem %s0, %s277
        %p279 = scmp.lt.s32.totalorder %s24, 1
        %s280 = scalar_select %p279, %s24, 1
        %s281 = smul.addr %s280, 36
        %s282 = smul.addr %s281, 4
        %s283 = scalar_lea.vmem %s1, %s282
        %s284 = smul.u32 16, %s25
        %p285 = scmp.lt.s32.totalorder %s24, 1
        %s286 = scalar_select %p285, %s24, 1
        %p287 = scmp.lt.s32.totalorder %s284, 15
        %s288 = scalar_select %p287, %s284, 15
        %s289 = smul.addr %s286, 16
        %s290 = sadd.s32 %s288, %s289
        %s291 = smul.addr %s290, 4
        %s292 = scalar_lea.vmem %s3, %s291
        %s293 = smul.u32 16, %s25
        %s294 = smul.u32 16, %s25
        %p295 = scmp.lt.s32.totalorder %s24, 1
        %s296 = scalar_select %p295, %s24, 1
        %p297 = scmp.lt.s32.totalorder %s294, 15
        %s298 = scalar_select %p297, %s294, 15
        %s299 = smul.addr %s296, 16
        %s300 = sadd.s32 %s298, %s299
        %s301 = smul.addr %s300, 4
        %s302 = scalar_lea.vmem %s4, %s301
        %s303 = smul.u32 16, %s25
        %s305 = smul.u32 %s25, 16
        %s306 = smul.u32 %s305, 2
        %s307 = smul.addr %s306, 4
        %s308 = scalar_lea.vmem %s278, %s307
        %v309 = vld [vmem:[%s308] sm:$0xf]
        %v310 = vld [vmem:[%s308 + $0x4] sm:$0xf]
        %v311 = vld [vmem:[%s308 + $0x8] sm:$0xf]
        %v312 = vld [vmem:[%s308 + $0xc] sm:$0xf]
        %v313 = vld [vmem:[%s308 + $0x10] sm:$0xf]
        %v314 = vld [vmem:[%s308 + $0x14] sm:$0xf]
        %v315 = vld [vmem:[%s308 + $0x18] sm:$0xf]
        %v316 = vld [vmem:[%s308 + $0x1c] sm:$0xf]
        %v317 = vld [vmem:[%s308 + $0x20] sm:$0xf]
        %v318 = vld [vmem:[%s308 + $0x24] sm:$0xf]
        %v319 = vld [vmem:[%s308 + $0x28] sm:$0xf]
        %v320 = vld [vmem:[%s308 + $0x2c] sm:$0xf]
        %v321 = vld [vmem:[%s308 + $0x30] sm:$0xf]
        %v322 = vld [vmem:[%s308 + $0x34] sm:$0xf]
        %v323 = vld [vmem:[%s308 + $0x38] sm:$0xf]
        %v324 = vld [vmem:[%s308 + $0x3c] sm:$0xf]
        %v325 = vld [vmem:[%s308 + $0x40] sm:$0xf]
        %v326 = vld [vmem:[%s308 + $0x44] sm:$0xf]
        %v327 = vld [vmem:[%s308 + $0x48] sm:$0xf]
        %v328 = vld [vmem:[%s308 + $0x4c] sm:$0xf]
        %v329 = vld [vmem:[%s308 + $0x50] sm:$0xf]
        %v330 = vld [vmem:[%s308 + $0x54] sm:$0xf]
        %v331 = vld [vmem:[%s308 + $0x58] sm:$0xf]
        %v332 = vld [vmem:[%s308 + $0x5c] sm:$0xf]
        %v333 = vld [vmem:[%s308 + $0x60] sm:$0xf]
        %v334 = vld [vmem:[%s308 + $0x64] sm:$0xf]
        %v335 = vld [vmem:[%s308 + $0x68] sm:$0xf]
        %v336 = vld [vmem:[%s308 + $0x6c] sm:$0xf]
        %v337 = vld [vmem:[%s308 + $0x70] sm:$0xf]
        %v338 = vld [vmem:[%s308 + $0x74] sm:$0xf]
        %v339 = vld [vmem:[%s308 + $0x78] sm:$0xf]
        %v340 = vld [vmem:[%s308 + $0x7c] sm:$0xf]
        %v341 = vld [vmem:[%s308 + $0x80] sm:$0xf]
        %v342 = vld [vmem:[%s308 + $0x84] sm:$0xf]
        %v343 = vld [vmem:[%s308 + $0x88] sm:$0xf]
        %v344 = vld [vmem:[%s308 + $0x8c] sm:$0xf]
        %s345 = smul.addr %s306, 4
        %s346 = scalar_lea.vmem %s283, %s345
        %v347 = vld [vmem:[%s346] sm:$0xf]
        %v348 = vld [vmem:[%s346 + $0x4] sm:$0xf]
        %v349 = vld [vmem:[%s346 + $0x8] sm:$0xf]
        %v350 = vld [vmem:[%s346 + $0xc] sm:$0xf]
        %v351 = vld [vmem:[%s346 + $0x10] sm:$0xf]
        %v352 = vld [vmem:[%s346 + $0x14] sm:$0xf]
        %v353 = vld [vmem:[%s346 + $0x18] sm:$0xf]
        %v354 = vld [vmem:[%s346 + $0x1c] sm:$0xf]
        %v355 = vld [vmem:[%s346 + $0x20] sm:$0xf]
        %v356 = vld [vmem:[%s346 + $0x24] sm:$0xf]
        %v357 = vld [vmem:[%s346 + $0x28] sm:$0xf]
        %v358 = vld [vmem:[%s346 + $0x2c] sm:$0xf]
        %v359 = vld [vmem:[%s346 + $0x30] sm:$0xf]
        %v360 = vld [vmem:[%s346 + $0x34] sm:$0xf]
        %v361 = vld [vmem:[%s346 + $0x38] sm:$0xf]
        %v362 = vld [vmem:[%s346 + $0x3c] sm:$0xf]
        %v363 = vld [vmem:[%s346 + $0x40] sm:$0xf]
        %v364 = vld [vmem:[%s346 + $0x44] sm:$0xf]
        %v365 = vld [vmem:[%s346 + $0x48] sm:$0xf]
        %v366 = vld [vmem:[%s346 + $0x4c] sm:$0xf]
        %v367 = vld [vmem:[%s346 + $0x50] sm:$0xf]
        %v368 = vld [vmem:[%s346 + $0x54] sm:$0xf]
        %v369 = vld [vmem:[%s346 + $0x58] sm:$0xf]
        %v370 = vld [vmem:[%s346 + $0x5c] sm:$0xf]
        %v371 = vld [vmem:[%s346 + $0x60] sm:$0xf]
        %v372 = vld [vmem:[%s346 + $0x64] sm:$0xf]
        %v373 = vld [vmem:[%s346 + $0x68] sm:$0xf]
        %v374 = vld [vmem:[%s346 + $0x6c] sm:$0xf]
        %v375 = vld [vmem:[%s346 + $0x70] sm:$0xf]
        %v376 = vld [vmem:[%s346 + $0x74] sm:$0xf]
        %v377 = vld [vmem:[%s346 + $0x78] sm:$0xf]
        %v378 = vld [vmem:[%s346 + $0x7c] sm:$0xf]
        %v379 = vld [vmem:[%s346 + $0x80] sm:$0xf]
        %v380 = vld [vmem:[%s346 + $0x84] sm:$0xf]
        %v381 = vld [vmem:[%s346 + $0x88] sm:$0xf]
        %v382 = vld [vmem:[%s346 + $0x8c] sm:$0xf]
        %v401 = vunpack.c.l.b16 %v347
        %v402 = vunpack.c.l.b16 %v349
        %v403 = vunpack.c.l.b16 %v351
        %v404 = vunpack.c.l.b16 %v353
        %v405 = vunpack.c.l.b16 %v355
        %v406 = vunpack.c.l.b16 %v357
        %v407 = vunpack.c.l.b16 %v359
        %v408 = vunpack.c.l.b16 %v361
        %v409 = vunpack.c.l.b16 %v363
        %v410 = vunpack.c.l.b16 %v365
        %v411 = vunpack.c.l.b16 %v367
        %v412 = vunpack.c.l.b16 %v369
        %v413 = vunpack.c.l.b16 %v371
        %v414 = vunpack.c.l.b16 %v373
        %v415 = vunpack.c.l.b16 %v375
        %v416 = vunpack.c.l.b16 %v377
        %v417 = vunpack.c.l.b16 %v379
        %v418 = vunpack.c.l.b16 %v381
        %v419 = vpack.c.b16 %v401, %v401
        %v420 = vpack.c.b16 %v402, %v402
        %v421 = vpack.c.b16 %v403, %v403
        %v422 = vpack.c.b16 %v404, %v404
        %v423 = vpack.c.b16 %v405, %v405
        %v424 = vpack.c.b16 %v406, %v406
        %v425 = vpack.c.b16 %v407, %v407
        %v426 = vpack.c.b16 %v408, %v408
        %v427 = vpack.c.b16 %v409, %v409
        %v428 = vpack.c.b16 %v410, %v410
        %v429 = vpack.c.b16 %v411, %v411
        %v430 = vpack.c.b16 %v412, %v412
        %v431 = vpack.c.b16 %v413, %v413
        %v432 = vpack.c.b16 %v414, %v414
        %v433 = vpack.c.b16 %v415, %v415
        %v434 = vpack.c.b16 %v416, %v416
        %v435 = vpack.c.b16 %v417, %v417
        %v436 = vpack.c.b16 %v418, %v418
        %437 = vrot.lane.b32.xlu0 %v419, 4
        %v438 = vpop.permute.xlu0 %437
        %439 = vrot.lane.b32.xlu0 %v420, 4
        %v440 = vpop.permute.xlu0 %439
        %441 = vrot.lane.b32.xlu0 %v421, 4
        %v442 = vpop.permute.xlu0 %441
        %443 = vrot.lane.b32.xlu0 %v422, 4
        %v444 = vpop.permute.xlu0 %443
        %445 = vrot.lane.b32.xlu0 %v423, 4
        %v446 = vpop.permute.xlu0 %445
        %447 = vrot.lane.b32.xlu0 %v424, 4
        %v448 = vpop.permute.xlu0 %447
        %449 = vrot.lane.b32.xlu0 %v425, 4
        %v450 = vpop.permute.xlu0 %449
        %451 = vrot.lane.b32.xlu0 %v426, 4
        %v452 = vpop.permute.xlu0 %451
        %453 = vrot.lane.b32.xlu0 %v427, 4
        %v454 = vpop.permute.xlu0 %453
        %455 = vrot.lane.b32.xlu0 %v428, 4
        %v456 = vpop.permute.xlu0 %455
        %457 = vrot.lane.b32.xlu0 %v429, 4
        %v458 = vpop.permute.xlu0 %457
        %459 = vrot.lane.b32.xlu0 %v430, 4
        %v460 = vpop.permute.xlu0 %459
        %461 = vrot.lane.b32.xlu0 %v431, 4
        %v462 = vpop.permute.xlu0 %461
        %463 = vrot.lane.b32.xlu0 %v432, 4
        %v464 = vpop.permute.xlu0 %463
        %465 = vrot.lane.b32.xlu0 %v433, 4
        %v466 = vpop.permute.xlu0 %465
        %467 = vrot.lane.b32.xlu0 %v434, 4
        %v468 = vpop.permute.xlu0 %467
        %469 = vrot.lane.b32.xlu0 %v435, 4
        %v470 = vpop.permute.xlu0 %469
        %471 = vrot.lane.b32.xlu0 %v436, 4
        %v472 = vpop.permute.xlu0 %471
        %v509 = vunpack.c.l.b16 %v309
        %v510 = vunpack.c.l.b16 %v310
        %v511 = vunpack.c.l.b16 %v311
        %v512 = vunpack.c.l.b16 %v312
        %v513 = vunpack.c.l.b16 %v313
        %v514 = vunpack.c.l.b16 %v314
        %v515 = vunpack.c.l.b16 %v315
        %v516 = vunpack.c.l.b16 %v316
        %v517 = vunpack.c.l.b16 %v317
        %v518 = vunpack.c.l.b16 %v318
        %v519 = vunpack.c.l.b16 %v319
        %v520 = vunpack.c.l.b16 %v320
        %v521 = vunpack.c.l.b16 %v321
        %v522 = vunpack.c.l.b16 %v322
        %v523 = vunpack.c.l.b16 %v323
        %v524 = vunpack.c.l.b16 %v324
        %v525 = vunpack.c.l.b16 %v325
        %v526 = vunpack.c.l.b16 %v326
        %v527 = vunpack.c.l.b16 %v327
        %v528 = vunpack.c.l.b16 %v328
        %v529 = vunpack.c.l.b16 %v329
        %v530 = vunpack.c.l.b16 %v330
        %v531 = vunpack.c.l.b16 %v331
        %v532 = vunpack.c.l.b16 %v332
        %v533 = vunpack.c.l.b16 %v333
        %v534 = vunpack.c.l.b16 %v334
        %v535 = vunpack.c.l.b16 %v335
        %v536 = vunpack.c.l.b16 %v336
        %v537 = vunpack.c.l.b16 %v337
        %v538 = vunpack.c.l.b16 %v338
        %v539 = vunpack.c.l.b16 %v339
        %v540 = vunpack.c.l.b16 %v340
        %v541 = vunpack.c.l.b16 %v341
        %v542 = vunpack.c.l.b16 %v342
        %v543 = vunpack.c.l.b16 %v343
        %v544 = vunpack.c.l.b16 %v344
        %v545 = vpack.c.b16 %v510, %v509
        %v546 = vpack.c.b16 %v512, %v511
        %v547 = vpack.c.b16 %v514, %v513
        %v548 = vpack.c.b16 %v516, %v515
        %v549 = vpack.c.b16 %v518, %v517
        %v550 = vpack.c.b16 %v520, %v519
        %v551 = vpack.c.b16 %v522, %v521
        %v552 = vpack.c.b16 %v524, %v523
        %v553 = vpack.c.b16 %v526, %v525
        %v554 = vpack.c.b16 %v528, %v527
        %v555 = vpack.c.b16 %v530, %v529
        %v556 = vpack.c.b16 %v532, %v531
        %v557 = vpack.c.b16 %v534, %v533
        %v558 = vpack.c.b16 %v536, %v535
        %v559 = vpack.c.b16 %v538, %v537
        %v560 = vpack.c.b16 %v540, %v539
        %v561 = vpack.c.b16 %v542, %v541
        %v562 = vpack.c.b16 %v544, %v543
        %v564 = vshrl.u32 %v545, 16
        %v566 = vshll.u32 %v545, 16
        %v568 = vrot.slane %v566, 1
        %v569 = vor.u32 %v564, %v568
        %v571 = vshrl.u32 %v546, 16
        %v573 = vshll.u32 %v546, 16
        %v575 = vrot.slane %v573, 1
        %v576 = vor.u32 %v571, %v575
        %v578 = vshrl.u32 %v547, 16
        %v580 = vshll.u32 %v547, 16
        %v582 = vrot.slane %v580, 1
        %v583 = vor.u32 %v578, %v582
        %v585 = vshrl.u32 %v548, 16
        %v587 = vshll.u32 %v548, 16
        %v589 = vrot.slane %v587, 1
        %v590 = vor.u32 %v585, %v589
        %v592 = vshrl.u32 %v549, 16
        %v594 = vshll.u32 %v549, 16
        %v596 = vrot.slane %v594, 1
        %v597 = vor.u32 %v592, %v596
        %v599 = vshrl.u32 %v550, 16
        %v601 = vshll.u32 %v550, 16
        %v603 = vrot.slane %v601, 1
        %v604 = vor.u32 %v599, %v603
        %v606 = vshrl.u32 %v551, 16
        %v608 = vshll.u32 %v551, 16
        %v610 = vrot.slane %v608, 1
        %v611 = vor.u32 %v606, %v610
        %v613 = vshrl.u32 %v552, 16
        %v615 = vshll.u32 %v552, 16
        %v617 = vrot.slane %v615, 1
        %v618 = vor.u32 %v613, %v617
        %v620 = vshrl.u32 %v553, 16
        %v622 = vshll.u32 %v553, 16
        %v624 = vrot.slane %v622, 1
        %v625 = vor.u32 %v620, %v624
        %v627 = vshrl.u32 %v554, 16
        %v629 = vshll.u32 %v554, 16
        %v631 = vrot.slane %v629, 1
        %v632 = vor.u32 %v627, %v631
        %v634 = vshrl.u32 %v555, 16
        %v636 = vshll.u32 %v555, 16
        %v638 = vrot.slane %v636, 1
        %v639 = vor.u32 %v634, %v638
        %v641 = vshrl.u32 %v556, 16
        %v643 = vshll.u32 %v556, 16
        %v645 = vrot.slane %v643, 1
        %v646 = vor.u32 %v641, %v645
        %v648 = vshrl.u32 %v557, 16
        %v650 = vshll.u32 %v557, 16
        %v652 = vrot.slane %v650, 1
        %v653 = vor.u32 %v648, %v652
        %v655 = vshrl.u32 %v558, 16
        %v657 = vshll.u32 %v558, 16
        %v659 = vrot.slane %v657, 1
        %v660 = vor.u32 %v655, %v659
        %v662 = vshrl.u32 %v559, 16
        %v664 = vshll.u32 %v559, 16
        %v666 = vrot.slane %v664, 1
        %v667 = vor.u32 %v662, %v666
        %v669 = vshrl.u32 %v560, 16
        %v671 = vshll.u32 %v560, 16
        %v673 = vrot.slane %v671, 1
        %v674 = vor.u32 %v669, %v673
        %v676 = vshrl.u32 %v561, 16
        %v678 = vshll.u32 %v561, 16
        %v680 = vrot.slane %v678, 1
        %v681 = vor.u32 %v676, %v680
        %v683 = vshrl.u32 %v562, 16
        %v685 = vshll.u32 %v562, 16
        %v687 = vrot.slane %v685, 1
        %v688 = vor.u32 %v683, %v687
        %689 = vrot.lane.b32.xlu0 %v569, 8
        %v690 = vpop.permute.xlu0 %689
        %691 = vrot.lane.b32.xlu0 %v576, 8
        %v692 = vpop.permute.xlu0 %691
        %693 = vrot.lane.b32.xlu0 %v583, 8
        %v694 = vpop.permute.xlu0 %693
        %695 = vrot.lane.b32.xlu0 %v590, 8
        %v696 = vpop.permute.xlu0 %695
        %697 = vrot.lane.b32.xlu0 %v597, 8
        %v698 = vpop.permute.xlu0 %697
        %699 = vrot.lane.b32.xlu0 %v604, 8
        %v700 = vpop.permute.xlu0 %699
        %701 = vrot.lane.b32.xlu0 %v611, 8
        %v702 = vpop.permute.xlu0 %701
        %703 = vrot.lane.b32.xlu0 %v618, 8
        %v704 = vpop.permute.xlu0 %703
        %705 = vrot.lane.b32.xlu0 %v625, 8
        %v706 = vpop.permute.xlu0 %705
        %707 = vrot.lane.b32.xlu0 %v632, 8
        %v708 = vpop.permute.xlu0 %707
        %709 = vrot.lane.b32.xlu0 %v639, 8
        %v710 = vpop.permute.xlu0 %709
        %711 = vrot.lane.b32.xlu0 %v646, 8
        %v712 = vpop.permute.xlu0 %711
        %713 = vrot.lane.b32.xlu0 %v653, 8
        %v714 = vpop.permute.xlu0 %713
        %715 = vrot.lane.b32.xlu0 %v660, 8
        %v716 = vpop.permute.xlu0 %715
        %717 = vrot.lane.b32.xlu0 %v667, 8
        %v718 = vpop.permute.xlu0 %717
        %719 = vrot.lane.b32.xlu0 %v674, 8
        %v720 = vpop.permute.xlu0 %719
        %721 = vrot.lane.b32.xlu0 %v681, 8
        %v722 = vpop.permute.xlu0 %721
        %723 = vrot.lane.b32.xlu0 %v688, 8
        %v724 = vpop.permute.xlu0 %723
        %vm725 = vcmask 31744
        %v728 = vsel %vm725, %v309, %v438
        %v731 = vsel %vm725, %v311, %v440
        %v734 = vsel %vm725, %v313, %v442
        %v737 = vsel %vm725, %v315, %v444
        %v740 = vsel %vm725, %v317, %v446
        %v743 = vsel %vm725, %v319, %v448
        %v746 = vsel %vm725, %v321, %v450
        %v749 = vsel %vm725, %v323, %v452
        %v752 = vsel %vm725, %v325, %v454
        %v755 = vsel %vm725, %v327, %v456
        %v758 = vsel %vm725, %v329, %v458
        %v761 = vsel %vm725, %v331, %v460
        %v764 = vsel %vm725, %v333, %v462
        %v767 = vsel %vm725, %v335, %v464
        %v770 = vsel %vm725, %v337, %v466
        %v773 = vsel %vm725, %v339, %v468
        %v776 = vsel %vm725, %v341, %v470
        %v779 = vsel %vm725, %v343, %v472
        %vm780 = vcmask 64512
        %v782 = vsel %vm780, %v728, %v690
        %v784 = vsel %vm780, %v731, %v692
        %v786 = vsel %vm780, %v734, %v694
        %v788 = vsel %vm780, %v737, %v696
        %v790 = vsel %vm780, %v740, %v698
        %v792 = vsel %vm780, %v743, %v700
        %v794 = vsel %vm780, %v746, %v702
        %v796 = vsel %vm780, %v749, %v704
        %v798 = vsel %vm780, %v752, %v706
        %v800 = vsel %vm780, %v755, %v708
        %v802 = vsel %vm780, %v758, %v710
        %v804 = vsel %vm780, %v761, %v712
        %v806 = vsel %vm780, %v764, %v714
        %v808 = vsel %vm780, %v767, %v716
        %v810 = vsel %vm780, %v770, %v718
        %v812 = vsel %vm780, %v773, %v720
        %v814 = vsel %vm780, %v776, %v722
        %v816 = vsel %vm780, %v779, %v724
        %v817 = vld [vmem:[%s2] sm:$0xf]
        %v818 = vld [vmem:[%s2 + $0x4] sm:$0x3]
        %s819 = scalar_lea.vmem %s2, 8
        %v820 = vld [vmem:[%s819] sm:$0xf]
        %v821 = vld [vmem:[%s819 + $0x4] sm:$0x3]
        %v838 = vunpack.c.l.b16 %v784
        %v839 = vunpack.c.l.b16 %v786
        %v840 = vunpack.c.l.b16 %v788
        %v841 = vunpack.c.l.b16 %v790
        %v842 = vunpack.c.l.b16 %v792
        %v843 = vunpack.c.l.b16 %v794
        %v844 = vunpack.c.l.b16 %v796
        %v845 = vunpack.c.l.b16 %v798
        %v846 = vunpack.c.l.b16 %v800
        %v847 = vunpack.c.l.b16 %v802
        %v848 = vunpack.c.l.b16 %v804
        %v849 = vunpack.c.l.b16 %v806
        %v850 = vunpack.c.l.b16 %v808
        %v851 = vunpack.c.l.b16 %v810
        %v852 = vunpack.c.l.b16 %v812
        %v853 = vunpack.c.l.b16 %v814
        %v854 = vpack.c.b16 %v839, %v838
        %v855 = vpack.c.b16 %v841, %v840
        %v856 = vpack.c.b16 %v843, %v842
        %v857 = vpack.c.b16 %v845, %v844
        %v858 = vpack.c.b16 %v847, %v846
        %v859 = vpack.c.b16 %v849, %v848
        %v860 = vpack.c.b16 %v851, %v850
        %v861 = vpack.c.b16 %v853, %v852
        %v864 = vunpack.c.l.b16 %v820
        %v865 = vunpack.c.l.b16 %v821
        %v866 = vpack.c.b16 %v865, %v864
        %vm867 = vcmask 97280
        %v869 = vsel %vm867, %v854, 0
        %v872 = vsel %vm867, %v855, 0
        %v875 = vsel %vm867, %v856, 0
        %v878 = vsel %vm867, %v857, 0
        %v881 = vsel %vm867, %v858, 0
        %v884 = vsel %vm867, %v859, 0
        %v887 = vsel %vm867, %v860, 0
        %v890 = vsel %vm867, %v861, 0
        %vm892 = vcmask 1045504
        %v894 = vsel %vm892, %v866, 0
        %896 = vmatprep.subr.bf16.mxu0 0
        %897 = vmatpush1.bf16.msra.mxu0 %v894
        %898 = vmatprep.subr.bf16.mxu0 0
        %899 = vmatpush1.bf16.msra.mxu0 0
        %900 = vmatprep.subr.bf16.mxu0 0
        %901 = vmatpush1.bf16.msra.mxu0 0
        %902 = vmatprep.subr.bf16.mxu0 0
        %903 = vmatpush1.bf16.msra.mxu0 0
        %904 = vmatprep.subr.bf16.mxu0 0
        %905 = vmatpush1.bf16.msra.mxu0 0
        %906 = vmatprep.subr.bf16.mxu0 0
        %907 = vmatpush1.bf16.msra.mxu0 0
        %908 = vmatprep.subr.bf16.mxu0 0
        %909 = vmatpush1.bf16.msra.mxu0 0
        %910 = vmatprep.subr.bf16.mxu0 0
        %911 = vmatpush1.bf16.msra.mxu0 0
        %912 = vmatprep.subr.bf16.mxu0 0
        %913 = vmatpush1.bf16.msra.mxu0 0
        %914 = vmatprep.subr.bf16.mxu0 0
        %915 = vmatpush1.bf16.msra.mxu0 0
        %916 = vmatprep.subr.bf16.mxu0 0
        %917 = vmatpush1.bf16.msra.mxu0 0
        %918 = vmatprep.subr.bf16.mxu0 0
        %919 = vmatpush1.bf16.msra.mxu0 0
        %920 = vmatprep.subr.bf16.mxu0 0
        %921 = vmatpush1.bf16.msra.mxu0 0
        %922 = vmatprep.subr.bf16.mxu0 0
        %923 = vmatpush1.bf16.msra.mxu0 0
        %924 = vmatprep.subr.bf16.mxu0 0
        %925 = vmatpush1.bf16.msra.mxu0 0
        %926 = vmatprep.subr.bf16.mxu0 0
        %927 = vmatpush1.bf16.msra.mxu0 0
        %928 = vmatprep.mubr.bf16.mxu0 0
        %929 = vmatmul.mubr.bf16.gmra.mrb[0].mxu0 %v869
        %v930 = vpop.f32.mrb[0].mxu0
        %v931 = vadd.f32 0.0, %v930
        %v932 = vpop.f32.mrb[0].mxu0
        %v933 = vpop.f32.mrb[0].mxu0
        %v934 = vadd.f32 0.0, %v933
        %v935 = vpop.f32.mrb[0].mxu0
        %936 = vmatprep.mubr.bf16.mxu0 0
        %937 = vmatmul.mubr.bf16.gmra.mrb[0].mxu0 %v872
        %v938 = vpop.f32.mrb[0].mxu0
        %v939 = vadd.f32 0.0, %v938
        %v940 = vpop.f32.mrb[0].mxu0
        %v941 = vpop.f32.mrb[0].mxu0
        %v942 = vadd.f32 0.0, %v941
        %v943 = vpop.f32.mrb[0].mxu0
        %944 = vmatprep.mubr.bf16.mxu0 0
        %945 = vmatmul.mubr.bf16.gmra.mrb[0].mxu0 %v875
        %v946 = vpop.f32.mrb[0].mxu0
        %v947 = vadd.f32 0.0, %v946
        %v948 = vpop.f32.mrb[0].mxu0
        %v949 = vpop.f32.mrb[0].mxu0
        %v950 = vadd.f32 0.0, %v949
        %v951 = vpop.f32.mrb[0].mxu0
        %952 = vmatprep.mubr.bf16.mxu0 0
        %953 = vmatmul.mubr.bf16.gmra.mrb[0].mxu0 %v878
        %v954 = vpop.f32.mrb[0].mxu0
        %v955 = vadd.f32 0.0, %v954
        %v956 = vpop.f32.mrb[0].mxu0
        %v957 = vpop.f32.mrb[0].mxu0
        %v958 = vadd.f32 0.0, %v957
        %v959 = vpop.f32.mrb[0].mxu0
        %960 = vmatprep.mubr.bf16.mxu0 0
        %961 = vmatmul.mubr.bf16.gmra.mrb[0].mxu0 %v881
        %v962 = vpop.f32.mrb[0].mxu0
        %v963 = vadd.f32 0.0, %v962
        %v964 = vpop.f32.mrb[0].mxu0
        %v965 = vpop.f32.mrb[0].mxu0
        %v966 = vadd.f32 0.0, %v965
        %v967 = vpop.f32.mrb[0].mxu0
        %968 = vmatprep.mubr.bf16.mxu0 0
        %969 = vmatmul.mubr.bf16.gmra.mrb[0].mxu0 %v884
        %v970 = vpop.f32.mrb[0].mxu0
        %v971 = vadd.f32 0.0, %v970
        %v972 = vpop.f32.mrb[0].mxu0
        %v973 = vpop.f32.mrb[0].mxu0
        %v974 = vadd.f32 0.0, %v973
        %v975 = vpop.f32.mrb[0].mxu0
        %976 = vmatprep.mubr.bf16.mxu0 0
        %977 = vmatmul.mubr.bf16.gmra.mrb[0].mxu0 %v887
        %v978 = vpop.f32.mrb[0].mxu0
        %v979 = vadd.f32 0.0, %v978
        %v980 = vpop.f32.mrb[0].mxu0
        %v981 = vpop.f32.mrb[0].mxu0
        %v982 = vadd.f32 0.0, %v981
        %v983 = vpop.f32.mrb[0].mxu0
        %984 = vmatprep.mubr.bf16.mxu0 0
        %985 = vmatmul.mubr.bf16.gmra.mrb[0].mxu0 %v890
        %v986 = vpop.f32.mrb[0].mxu0
        %v987 = vadd.f32 0.0, %v986
        %v988 = vpop.f32.mrb[0].mxu0
        %v989 = vpop.f32.mrb[0].mxu0
        %v990 = vadd.f32 0.0, %v989
        %v991 = vpop.f32.mrb[0].mxu0
        %992 = vdwg.mxu0
        %v994 = vunpack.c.l.b16 %v782
        %v995 = vpack.c.b16 %v838, %v994
        %v996 = vpack.c.b16 %v840, %v839
        %v997 = vpack.c.b16 %v842, %v841
        %v998 = vpack.c.b16 %v844, %v843
        %v999 = vpack.c.b16 %v846, %v845
        %v1000 = vpack.c.b16 %v848, %v847
        %v1001 = vpack.c.b16 %v850, %v849
        %v1002 = vpack.c.b16 %v852, %v851
        %v1005 = vunpack.c.l.b16 %v817
        %v1006 = vunpack.c.l.b16 %v818
        %v1007 = vpack.c.b16 %v1006, %v1005
        %v1009 = vsel %vm867, %v995, 0
        %v1012 = vsel %vm867, %v996, 0
        %v1015 = vsel %vm867, %v997, 0
        %v1018 = vsel %vm867, %v998, 0
        %v1021 = vsel %vm867, %v999, 0
        %v1024 = vsel %vm867, %v1000, 0
        %v1027 = vsel %vm867, %v1001, 0
        %v1030 = vsel %vm867, %v1002, 0
        %v1033 = vsel %vm892, %v1007, 0
        %1035 = vmatprep.subr.bf16.mxu0 0
        %1036 = vmatpush1.bf16.msra.mxu0 %v1033
        %1037 = vmatprep.subr.bf16.mxu0 0
        %1038 = vmatpush1.bf16.msra.mxu0 0
        %1039 = vmatprep.subr.bf16.mxu0 0
        %1040 = vmatpush1.bf16.msra.mxu0 0
        %1041 = vmatprep.subr.bf16.mxu0 0
        %1042 = vmatpush1.bf16.msra.mxu0 0
        %1043 = vmatprep.subr.bf16.mxu0 0
        %1044 = vmatpush1.bf16.msra.mxu0 0
        %1045 = vmatprep.subr.bf16.mxu0 0
        %1046 = vmatpush1.bf16.msra.mxu0 0
        %1047 = vmatprep.subr.bf16.mxu0 0
        %1048 = vmatpush1.bf16.msra.mxu0 0
        %1049 = vmatprep.subr.bf16.mxu0 0
        %1050 = vmatpush1.bf16.msra.mxu0 0
        %1051 = vmatprep.subr.bf16.mxu0 0
        %1052 = vmatpush1.bf16.msra.mxu0 0
        %1053 = vmatprep.subr.bf16.mxu0 0
        %1054 = vmatpush1.bf16.msra.mxu0 0
        %1055 = vmatprep.subr.bf16.mxu0 0
        %1056 = vmatpush1.bf16.msra.mxu0 0
        %1057 = vmatprep.subr.bf16.mxu0 0
        %1058 = vmatpush1.bf16.msra.mxu0 0
        %1059 = vmatprep.subr.bf16.mxu0 0
        %1060 = vmatpush1.bf16.msra.mxu0 0
        %1061 = vmatprep.subr.bf16.mxu0 0
        %1062 = vmatpush1.bf16.msra.mxu0 0
        %1063 = vmatprep.subr.bf16.mxu0 0
        %1064 = vmatpush1.bf16.msra.mxu0 0
        %1065 = vmatprep.subr.bf16.mxu0 0
        %1066 = vmatpush1.bf16.msra.mxu0 0
        %1067 = vmatprep.mubr.bf16.mxu0 0
        %1068 = vmatmul.mubr.bf16.gmra.mrb[0].mxu0 %v1009
        %v1069 = vpop.f32.mrb[0].mxu0
        %v1070 = vadd.f32 %v931, %v1069
        %v1071 = vpop.f32.mrb[0].mxu0
        %v1072 = vpop.f32.mrb[0].mxu0
        %v1073 = vadd.f32 %v934, %v1072
        %v1074 = vpop.f32.mrb[0].mxu0
        %1075 = vmatprep.mubr.bf16.mxu0 0
        %1076 = vmatmul.mubr.bf16.gmra.mrb[0].mxu0 %v1012
        %v1077 = vpop.f32.mrb[0].mxu0
        %v1078 = vadd.f32 %v939, %v1077
        %v1079 = vpop.f32.mrb[0].mxu0
        %v1080 = vpop.f32.mrb[0].mxu0
        %v1081 = vadd.f32 %v942, %v1080
        %v1082 = vpop.f32.mrb[0].mxu0
        %1083 = vmatprep.mubr.bf16.mxu0 0
        %1084 = vmatmul.mubr.bf16.gmra.mrb[0].mxu0 %v1015
        %v1085 = vpop.f32.mrb[0].mxu0
        %v1086 = vadd.f32 %v947, %v1085
        %v1087 = vpop.f32.mrb[0].mxu0
        %v1088 = vpop.f32.mrb[0].mxu0
        %v1089 = vadd.f32 %v950, %v1088
        %v1090 = vpop.f32.mrb[0].mxu0
        %1091 = vmatprep.mubr.bf16.mxu0 0
        %1092 = vmatmul.mubr.bf16.gmra.mrb[0].mxu0 %v1018
        %v1093 = vpop.f32.mrb[0].mxu0
        %v1094 = vadd.f32 %v955, %v1093
        %v1095 = vpop.f32.mrb[0].mxu0
        %v1096 = vpop.f32.mrb[0].mxu0
        %v1097 = vadd.f32 %v958, %v1096
        %v1098 = vpop.f32.mrb[0].mxu0
        %1099 = vmatprep.mubr.bf16.mxu0 0
        %1100 = vmatmul.mubr.bf16.gmra.mrb[0].mxu0 %v1021
        %v1101 = vpop.f32.mrb[0].mxu0
        %v1102 = vadd.f32 %v963, %v1101
        %v1103 = vpop.f32.mrb[0].mxu0
        %v1104 = vpop.f32.mrb[0].mxu0
        %v1105 = vadd.f32 %v966, %v1104
        %v1106 = vpop.f32.mrb[0].mxu0
        %1107 = vmatprep.mubr.bf16.mxu0 0
        %1108 = vmatmul.mubr.bf16.gmra.mrb[0].mxu0 %v1024
        %v1109 = vpop.f32.mrb[0].mxu0
        %v1110 = vadd.f32 %v971, %v1109
        %v1111 = vpop.f32.mrb[0].mxu0
        %v1112 = vpop.f32.mrb[0].mxu0
        %v1113 = vadd.f32 %v974, %v1112
        %v1114 = vpop.f32.mrb[0].mxu0
        %1115 = vmatprep.mubr.bf16.mxu0 0
        %1116 = vmatmul.mubr.bf16.gmra.mrb[0].mxu0 %v1027
        %v1117 = vpop.f32.mrb[0].mxu0
        %v1118 = vadd.f32 %v979, %v1117
        %v1119 = vpop.f32.mrb[0].mxu0
        %v1120 = vpop.f32.mrb[0].mxu0
        %v1121 = vadd.f32 %v982, %v1120
        %v1122 = vpop.f32.mrb[0].mxu0
        %1123 = vmatprep.mubr.bf16.mxu0 0
        %1124 = vmatmul.mubr.bf16.gmra.mrb[0].mxu0 %v1030
        %v1125 = vpop.f32.mrb[0].mxu0
        %v1126 = vadd.f32 %v987, %v1125
        %v1127 = vpop.f32.mrb[0].mxu0
        %v1128 = vpop.f32.mrb[0].mxu0
        %v1129 = vadd.f32 %v990, %v1128
        %v1130 = vpop.f32.mrb[0].mxu0
        %1131 = vdwg.mxu0
        %s1132 = scalar_lea.vmem %s2, 16
        %v1133 = vld [vmem:[%s1132] sm:$0xf]
        %v1134 = vld [vmem:[%s1132 + $0x4] sm:$0x3]
        %v1136 = vunpack.c.l.b16 %v816
        %v1137 = vpack.c.b16 %v1136, %v853
        %v1140 = vunpack.c.l.b16 %v1133
        %v1141 = vunpack.c.l.b16 %v1134
        %v1142 = vpack.c.b16 %v1141, %v1140
        %v1144 = vsel %vm867, %v1137, 0
        %v1147 = vsel %vm892, %v1142, 0
        %1149 = vmatprep.subr.bf16.mxu0 0
        %1150 = vmatpush1.bf16.msra.mxu0 %v1147
        %1151 = vmatprep.subr.bf16.mxu0 0
        %1152 = vmatpush1.bf16.msra.mxu0 0
        %1153 = vmatprep.subr.bf16.mxu0 0
        %1154 = vmatpush1.bf16.msra.mxu0 0
        %1155 = vmatprep.subr.bf16.mxu0 0
        %1156 = vmatpush1.bf16.msra.mxu0 0
        %1157 = vmatprep.subr.bf16.mxu0 0
        %1158 = vmatpush1.bf16.msra.mxu0 0
        %1159 = vmatprep.subr.bf16.mxu0 0
        %1160 = vmatpush1.bf16.msra.mxu0 0
        %1161 = vmatprep.subr.bf16.mxu0 0
        %1162 = vmatpush1.bf16.msra.mxu0 0
        %1163 = vmatprep.subr.bf16.mxu0 0
        %1164 = vmatpush1.bf16.msra.mxu0 0
        %1165 = vmatprep.subr.bf16.mxu0 0
        %1166 = vmatpush1.bf16.msra.mxu0 0
        %1167 = vmatprep.subr.bf16.mxu0 0
        %1168 = vmatpush1.bf16.msra.mxu0 0
        %1169 = vmatprep.subr.bf16.mxu0 0
        %1170 = vmatpush1.bf16.msra.mxu0 0
        %1171 = vmatprep.subr.bf16.mxu0 0
        %1172 = vmatpush1.bf16.msra.mxu0 0
        %1173 = vmatprep.subr.bf16.mxu0 0
        %1174 = vmatpush1.bf16.msra.mxu0 0
        %1175 = vmatprep.subr.bf16.mxu0 0
        %1176 = vmatpush1.bf16.msra.mxu0 0
        %1177 = vmatprep.subr.bf16.mxu0 0
        %1178 = vmatpush1.bf16.msra.mxu0 0
        %1179 = vmatprep.subr.bf16.mxu0 0
        %1180 = vmatpush1.bf16.msra.mxu0 0
        %1181 = vmatprep.mubr.bf16.mxu0 0
        %1182 = vmatmul.mubr.bf16.gmra.mrb[0].mxu0 %v1012
        %v1183 = vpop.f32.mrb[0].mxu0
        %v1184 = vadd.f32 0.0, %v1183
        %v1185 = vpop.f32.mrb[0].mxu0
        %v1186 = vpop.f32.mrb[0].mxu0
        %v1187 = vadd.f32 0.0, %v1186
        %v1188 = vpop.f32.mrb[0].mxu0
        %1189 = vmatprep.mubr.bf16.mxu0 0
        %1190 = vmatmul.mubr.bf16.gmra.mrb[0].mxu0 %v1015
        %v1191 = vpop.f32.mrb[0].mxu0
        %v1192 = vadd.f32 0.0, %v1191
        %v1193 = vpop.f32.mrb[0].mxu0
        %v1194 = vpop.f32.mrb[0].mxu0
        %v1195 = vadd.f32 0.0, %v1194
        %v1196 = vpop.f32.mrb[0].mxu0
        %1197 = vmatprep.mubr.bf16.mxu0 0
        %1198 = vmatmul.mubr.bf16.gmra.mrb[0].mxu0 %v1018
        %v1199 = vpop.f32.mrb[0].mxu0
        %v1200 = vadd.f32 0.0, %v1199
        %v1201 = vpop.f32.mrb[0].mxu0
        %v1202 = vpop.f32.mrb[0].mxu0
        %v1203 = vadd.f32 0.0, %v1202
        %v1204 = vpop.f32.mrb[0].mxu0
        %1205 = vmatprep.mubr.bf16.mxu0 0
        %1206 = vmatmul.mubr.bf16.gmra.mrb[0].mxu0 %v1021
        %v1207 = vpop.f32.mrb[0].mxu0
        %v1208 = vadd.f32 0.0, %v1207
        %v1209 = vpop.f32.mrb[0].mxu0
        %v1210 = vpop.f32.mrb[0].mxu0
        %v1211 = vadd.f32 0.0, %v1210
        %v1212 = vpop.f32.mrb[0].mxu0
        %1213 = vmatprep.mubr.bf16.mxu0 0
        %1214 = vmatmul.mubr.bf16.gmra.mrb[0].mxu0 %v1024
        %v1215 = vpop.f32.mrb[0].mxu0
        %v1216 = vadd.f32 0.0, %v1215
        %v1217 = vpop.f32.mrb[0].mxu0
        %v1218 = vpop.f32.mrb[0].mxu0
        %v1219 = vadd.f32 0.0, %v1218
        %v1220 = vpop.f32.mrb[0].mxu0
        %1221 = vmatprep.mubr.bf16.mxu0 0
        %1222 = vmatmul.mubr.bf16.gmra.mrb[0].mxu0 %v1027
        %v1223 = vpop.f32.mrb[0].mxu0
        %v1224 = vadd.f32 0.0, %v1223
        %v1225 = vpop.f32.mrb[0].mxu0
        %v1226 = vpop.f32.mrb[0].mxu0
        %v1227 = vadd.f32 0.0, %v1226
        %v1228 = vpop.f32.mrb[0].mxu0
        %1229 = vmatprep.mubr.bf16.mxu0 0
        %1230 = vmatmul.mubr.bf16.gmra.mrb[0].mxu0 %v1030
        %v1231 = vpop.f32.mrb[0].mxu0
        %v1232 = vadd.f32 0.0, %v1231
        %v1233 = vpop.f32.mrb[0].mxu0
        %v1234 = vpop.f32.mrb[0].mxu0
        %v1235 = vadd.f32 0.0, %v1234
        %v1236 = vpop.f32.mrb[0].mxu0
        %1237 = vmatprep.mubr.bf16.mxu0 0
        %1238 = vmatmul.mubr.bf16.gmra.mrb[0].mxu0 %v1144
        %v1239 = vpop.f32.mrb[0].mxu0
        %v1240 = vadd.f32 0.0, %v1239
        %v1241 = vpop.f32.mrb[0].mxu0
        %v1242 = vpop.f32.mrb[0].mxu0
        %v1243 = vadd.f32 0.0, %v1242
        %v1244 = vpop.f32.mrb[0].mxu0
        %1245 = vdwg.mxu0
        %v1246 = vadd.f32 %v1070, %v1184
        %v1247 = vadd.f32 %v1073, %v1187
        %v1248 = vadd.f32 %v1078, %v1192
        %v1249 = vadd.f32 %v1081, %v1195
        %v1250 = vadd.f32 %v1086, %v1200
        %v1251 = vadd.f32 %v1089, %v1203
        %v1252 = vadd.f32 %v1094, %v1208
        %v1253 = vadd.f32 %v1097, %v1211
        %v1254 = vadd.f32 %v1102, %v1216
        %v1255 = vadd.f32 %v1105, %v1219
        %v1256 = vadd.f32 %v1110, %v1224
        %v1257 = vadd.f32 %v1113, %v1227
        %v1258 = vadd.f32 %v1118, %v1232
        %v1259 = vadd.f32 %v1121, %v1235
        %v1260 = vadd.f32 %v1126, %v1240
        %v1261 = vadd.f32 %v1129, %v1243
        %v1262 = vpack.c.bf16 %v1246, %v1246
        %v1263 = vpack.c.bf16 %v1247, %v1247
        %v1264 = vpack.c.bf16 %v1248, %v1248
        %v1265 = vpack.c.bf16 %v1249, %v1249
        %v1266 = vpack.c.bf16 %v1250, %v1250
        %v1267 = vpack.c.bf16 %v1251, %v1251
        %v1268 = vpack.c.bf16 %v1252, %v1252
        %v1269 = vpack.c.bf16 %v1253, %v1253
        %v1270 = vpack.c.bf16 %v1254, %v1254
        %v1271 = vpack.c.bf16 %v1255, %v1255
        %v1272 = vpack.c.bf16 %v1256, %v1256
        %v1273 = vpack.c.bf16 %v1257, %v1257
        %v1274 = vpack.c.bf16 %v1258, %v1258
        %v1275 = vpack.c.bf16 %v1259, %v1259
        %v1276 = vpack.c.bf16 %v1260, %v1260
        %v1277 = vpack.c.bf16 %v1261, %v1261
        %vm1278 = vcmask 60416
        %1279 = vst.msk [vmem:[%s292] sm:$0xf] %vm1278, %v1262
        %1280 = vst.msk [vmem:[%s292 + $0x4] sm:$0xf] %vm1278, %v1263
        %1281 = vst.msk [vmem:[%s292 + $0x8] sm:$0xf] %vm1278, %v1264
        %1282 = vst.msk [vmem:[%s292 + $0xc] sm:$0xf] %vm1278, %v1265
        %1283 = vst.msk [vmem:[%s292 + $0x10] sm:$0xf] %vm1278, %v1266
        %1284 = vst.msk [vmem:[%s292 + $0x14] sm:$0xf] %vm1278, %v1267
        %1285 = vst.msk [vmem:[%s292 + $0x18] sm:$0xf] %vm1278, %v1268
        %1286 = vst.msk [vmem:[%s292 + $0x1c] sm:$0xf] %vm1278, %v1269
        %1287 = vst.msk [vmem:[%s292 + $0x20] sm:$0xf] %vm1278, %v1270
        %1288 = vst.msk [vmem:[%s292 + $0x24] sm:$0xf] %vm1278, %v1271
        %1289 = vst.msk [vmem:[%s292 + $0x28] sm:$0xf] %vm1278, %v1272
        %1290 = vst.msk [vmem:[%s292 + $0x2c] sm:$0xf] %vm1278, %v1273
        %1291 = vst.msk [vmem:[%s292 + $0x30] sm:$0xf] %vm1278, %v1274
        %1292 = vst.msk [vmem:[%s292 + $0x34] sm:$0xf] %vm1278, %v1275
        %1293 = vst.msk [vmem:[%s292 + $0x38] sm:$0xf] %vm1278, %v1276
        %1294 = vst.msk [vmem:[%s292 + $0x3c] sm:$0xf] %vm1278, %v1277
        %v1295 = vsel %vm780, %v1246, 0.0
        %v1296 = vsel %vm780, %v1247, 0.0
        %v1297 = vadd.f32 %v1295, %v1296
        %v1298 = vsel %vm780, %v1248, 0.0
        %v1299 = vadd.f32 %v1297, %v1298
        %v1300 = vsel %vm780, %v1249, 0.0
        %v1301 = vadd.f32 %v1299, %v1300
        %v1302 = vsel %vm780, %v1250, 0.0
        %v1303 = vadd.f32 %v1301, %v1302
        %v1304 = vsel %vm780, %v1251, 0.0
        %v1305 = vadd.f32 %v1303, %v1304
        %v1306 = vsel %vm780, %v1252, 0.0
        %v1307 = vadd.f32 %v1305, %v1306
        %v1308 = vsel %vm780, %v1253, 0.0
        %v1309 = vadd.f32 %v1307, %v1308
        %v1310 = vsel %vm780, %v1254, 0.0
        %v1311 = vadd.f32 %v1309, %v1310
        %v1312 = vsel %vm780, %v1255, 0.0
        %v1313 = vadd.f32 %v1311, %v1312
        %v1314 = vsel %vm780, %v1256, 0.0
        %v1315 = vadd.f32 %v1313, %v1314
        %v1316 = vsel %vm780, %v1257, 0.0
        %v1317 = vadd.f32 %v1315, %v1316
        %v1318 = vsel %vm780, %v1258, 0.0
        %v1319 = vadd.f32 %v1317, %v1318
        %v1320 = vsel %vm780, %v1259, 0.0
        %v1321 = vadd.f32 %v1319, %v1320
        %v1322 = vsel %vm780, %v1260, 0.0
        %v1323 = vadd.f32 %v1321, %v1322
        %v1324 = vsel %vm780, %v1261, 0.0
        %v1325 = vadd.f32 %v1323, %v1324
        %v1326 = vrot.slane %v1325, 4
        %v1327 = vadd.f32 %v1325, %v1326
        %v1328 = vrot.slane %v1327, 2
        %v1329 = vadd.f32 %v1327, %v1328
        %v1330 = vrot.slane %v1329, 1
        %v1331 = vadd.f32 %v1329, %v1330
        %v1332 = vmul.f32 %v1246, %v1246
        %v1333 = vmul.f32 %v1247, %v1247
        %v1334 = vmul.f32 %v1248, %v1248
        %v1335 = vmul.f32 %v1249, %v1249
        %v1336 = vmul.f32 %v1250, %v1250
        %v1337 = vmul.f32 %v1251, %v1251
        %v1338 = vmul.f32 %v1252, %v1252
        %v1339 = vmul.f32 %v1253, %v1253
        %v1340 = vmul.f32 %v1254, %v1254
        %v1341 = vmul.f32 %v1255, %v1255
        %v1342 = vmul.f32 %v1256, %v1256
        %v1343 = vmul.f32 %v1257, %v1257
        %v1344 = vmul.f32 %v1258, %v1258
        %v1345 = vmul.f32 %v1259, %v1259
        %v1346 = vmul.f32 %v1260, %v1260
        %v1347 = vmul.f32 %v1261, %v1261
        %v1348 = vsel %vm780, %v1332, 0.0
        %v1349 = vsel %vm780, %v1333, 0.0
        %v1350 = vadd.f32 %v1348, %v1349
        %v1351 = vsel %vm780, %v1334, 0.0
        %v1352 = vadd.f32 %v1350, %v1351
        %v1353 = vsel %vm780, %v1335, 0.0
        %v1354 = vadd.f32 %v1352, %v1353
        %v1355 = vsel %vm780, %v1336, 0.0
        %v1356 = vadd.f32 %v1354, %v1355
        %v1357 = vsel %vm780, %v1337, 0.0
        %v1358 = vadd.f32 %v1356, %v1357
        %v1359 = vsel %vm780, %v1338, 0.0
        %v1360 = vadd.f32 %v1358, %v1359
        %v1361 = vsel %vm780, %v1339, 0.0
        %v1362 = vadd.f32 %v1360, %v1361
        %v1363 = vsel %vm780, %v1340, 0.0
        %v1364 = vadd.f32 %v1362, %v1363
        %v1365 = vsel %vm780, %v1341, 0.0
        %v1366 = vadd.f32 %v1364, %v1365
        %v1367 = vsel %vm780, %v1342, 0.0
        %v1368 = vadd.f32 %v1366, %v1367
        %v1369 = vsel %vm780, %v1343, 0.0
        %v1370 = vadd.f32 %v1368, %v1369
        %v1371 = vsel %vm780, %v1344, 0.0
        %v1372 = vadd.f32 %v1370, %v1371
        %v1373 = vsel %vm780, %v1345, 0.0
        %v1374 = vadd.f32 %v1372, %v1373
        %v1375 = vsel %vm780, %v1346, 0.0
        %v1376 = vadd.f32 %v1374, %v1375
        %v1377 = vsel %vm780, %v1347, 0.0
        %v1378 = vadd.f32 %v1376, %v1377
        %v1379 = vrot.slane %v1378, 4
        %v1380 = vadd.f32 %v1378, %v1379
        %v1381 = vrot.slane %v1380, 2
        %v1382 = vadd.f32 %v1380, %v1381
        %v1383 = vrot.slane %v1382, 1
        %v1384 = vadd.f32 %v1382, %v1383
        %1385 = vrot.lane.b32.xlu0 %v569, 4
        %v1386 = vpop.permute.xlu0 %1385
        %1387 = vrot.lane.b32.xlu0 %v576, 4
        %v1388 = vpop.permute.xlu0 %1387
        %1389 = vrot.lane.b32.xlu0 %v583, 4
        %v1390 = vpop.permute.xlu0 %1389
        %1391 = vrot.lane.b32.xlu0 %v590, 4
        %v1392 = vpop.permute.xlu0 %1391
        %1393 = vrot.lane.b32.xlu0 %v597, 4
        %v1394 = vpop.permute.xlu0 %1393
        %1395 = vrot.lane.b32.xlu0 %v604, 4
        %v1396 = vpop.permute.xlu0 %1395
        %1397 = vrot.lane.b32.xlu0 %v611, 4
        %v1398 = vpop.permute.xlu0 %1397
        %1399 = vrot.lane.b32.xlu0 %v618, 4
        %v1400 = vpop.permute.xlu0 %1399
        %1401 = vrot.lane.b32.xlu0 %v625, 4
        %v1402 = vpop.permute.xlu0 %1401
        %1403 = vrot.lane.b32.xlu0 %v632, 4
        %v1404 = vpop.permute.xlu0 %1403
        %1405 = vrot.lane.b32.xlu0 %v639, 4
        %v1406 = vpop.permute.xlu0 %1405
        %1407 = vrot.lane.b32.xlu0 %v646, 4
        %v1408 = vpop.permute.xlu0 %1407
        %1409 = vrot.lane.b32.xlu0 %v653, 4
        %v1410 = vpop.permute.xlu0 %1409
        %1411 = vrot.lane.b32.xlu0 %v660, 4
        %v1412 = vpop.permute.xlu0 %1411
        %1413 = vrot.lane.b32.xlu0 %v667, 4
        %v1414 = vpop.permute.xlu0 %1413
        %1415 = vrot.lane.b32.xlu0 %v674, 4
        %v1416 = vpop.permute.xlu0 %1415
        %1417 = vrot.lane.b32.xlu0 %v681, 4
        %v1418 = vpop.permute.xlu0 %1417
        %1419 = vrot.lane.b32.xlu0 %v688, 4
        %v1420 = vpop.permute.xlu0 %1419
        %v1439 = vunpack.c.l.b16 %v348
        %v1440 = vunpack.c.l.b16 %v350
        %v1441 = vunpack.c.l.b16 %v352
        %v1442 = vunpack.c.l.b16 %v354
        %v1443 = vunpack.c.l.b16 %v356
        %v1444 = vunpack.c.l.b16 %v358
        %v1445 = vunpack.c.l.b16 %v360
        %v1446 = vunpack.c.l.b16 %v362
        %v1447 = vunpack.c.l.b16 %v364
        %v1448 = vunpack.c.l.b16 %v366
        %v1449 = vunpack.c.l.b16 %v368
        %v1450 = vunpack.c.l.b16 %v370
        %v1451 = vunpack.c.l.b16 %v372
        %v1452 = vunpack.c.l.b16 %v374
        %v1453 = vunpack.c.l.b16 %v376
        %v1454 = vunpack.c.l.b16 %v378
        %v1455 = vunpack.c.l.b16 %v380
        %v1456 = vunpack.c.l.b16 %v382
        %v1457 = vpack.c.b16 %v1439, %v401
        %v1458 = vpack.c.b16 %v1440, %v402
        %v1459 = vpack.c.b16 %v1441, %v403
        %v1460 = vpack.c.b16 %v1442, %v404
        %v1461 = vpack.c.b16 %v1443, %v405
        %v1462 = vpack.c.b16 %v1444, %v406
        %v1463 = vpack.c.b16 %v1445, %v407
        %v1464 = vpack.c.b16 %v1446, %v408
        %v1465 = vpack.c.b16 %v1447, %v409
        %v1466 = vpack.c.b16 %v1448, %v410
        %v1467 = vpack.c.b16 %v1449, %v411
        %v1468 = vpack.c.b16 %v1450, %v412
        %v1469 = vpack.c.b16 %v1451, %v413
        %v1470 = vpack.c.b16 %v1452, %v414
        %v1471 = vpack.c.b16 %v1453, %v415
        %v1472 = vpack.c.b16 %v1454, %v416
        %v1473 = vpack.c.b16 %v1455, %v417
        %v1474 = vpack.c.b16 %v1456, %v418
        %v1476 = vshrl.u32 %v1457, 16
        %v1478 = vshll.u32 %v1457, 16
        %v1480 = vrot.slane %v1478, 1
        %v1481 = vor.u32 %v1476, %v1480
        %v1483 = vshrl.u32 %v1458, 16
        %v1485 = vshll.u32 %v1458, 16
        %v1487 = vrot.slane %v1485, 1
        %v1488 = vor.u32 %v1483, %v1487
        %v1490 = vshrl.u32 %v1459, 16
        %v1492 = vshll.u32 %v1459, 16
        %v1494 = vrot.slane %v1492, 1
        %v1495 = vor.u32 %v1490, %v1494
        %v1497 = vshrl.u32 %v1460, 16
        %v1499 = vshll.u32 %v1460, 16
        %v1501 = vrot.slane %v1499, 1
        %v1502 = vor.u32 %v1497, %v1501
        %v1504 = vshrl.u32 %v1461, 16
        %v1506 = vshll.u32 %v1461, 16
        %v1508 = vrot.slane %v1506, 1
        %v1509 = vor.u32 %v1504, %v1508
        %v1511 = vshrl.u32 %v1462, 16
        %v1513 = vshll.u32 %v1462, 16
        %v1515 = vrot.slane %v1513, 1
        %v1516 = vor.u32 %v1511, %v1515
        %v1518 = vshrl.u32 %v1463, 16
        %v1520 = vshll.u32 %v1463, 16
        %v1522 = vrot.slane %v1520, 1
        %v1523 = vor.u32 %v1518, %v1522
        %v1525 = vshrl.u32 %v1464, 16
        %v1527 = vshll.u32 %v1464, 16
        %v1529 = vrot.slane %v1527, 1
        %v1530 = vor.u32 %v1525, %v1529
        %v1532 = vshrl.u32 %v1465, 16
        %v1534 = vshll.u32 %v1465, 16
        %v1536 = vrot.slane %v1534, 1
        %v1537 = vor.u32 %v1532, %v1536
        %v1539 = vshrl.u32 %v1466, 16
        %v1541 = vshll.u32 %v1466, 16
        %v1543 = vrot.slane %v1541, 1
        %v1544 = vor.u32 %v1539, %v1543
        %v1546 = vshrl.u32 %v1467, 16
        %v1548 = vshll.u32 %v1467, 16
        %v1550 = vrot.slane %v1548, 1
        %v1551 = vor.u32 %v1546, %v1550
        %v1553 = vshrl.u32 %v1468, 16
        %v1555 = vshll.u32 %v1468, 16
        %v1557 = vrot.slane %v1555, 1
        %v1558 = vor.u32 %v1553, %v1557
        %v1560 = vshrl.u32 %v1469, 16
        %v1562 = vshll.u32 %v1469, 16
        %v1564 = vrot.slane %v1562, 1
        %v1565 = vor.u32 %v1560, %v1564
        %v1567 = vshrl.u32 %v1470, 16
        %v1569 = vshll.u32 %v1470, 16
        %v1571 = vrot.slane %v1569, 1
        %v1572 = vor.u32 %v1567, %v1571
        %v1574 = vshrl.u32 %v1471, 16
        %v1576 = vshll.u32 %v1471, 16
        %v1578 = vrot.slane %v1576, 1
        %v1579 = vor.u32 %v1574, %v1578
        %v1581 = vshrl.u32 %v1472, 16
        %v1583 = vshll.u32 %v1472, 16
        %v1585 = vrot.slane %v1583, 1
        %v1586 = vor.u32 %v1581, %v1585
        %v1588 = vshrl.u32 %v1473, 16
        %v1590 = vshll.u32 %v1473, 16
        %v1592 = vrot.slane %v1590, 1
        %v1593 = vor.u32 %v1588, %v1592
        %v1595 = vshrl.u32 %v1474, 16
        %v1597 = vshll.u32 %v1474, 16
        %v1599 = vrot.slane %v1597, 1
        %v1600 = vor.u32 %v1595, %v1599
        %1601 = vrot.lane.b32.xlu0 %v1481, 8
        %v1602 = vpop.permute.xlu0 %1601
        %1603 = vrot.lane.b32.xlu0 %v1488, 8
        %v1604 = vpop.permute.xlu0 %1603
        %1605 = vrot.lane.b32.xlu0 %v1495, 8
        %v1606 = vpop.permute.xlu0 %1605
        %1607 = vrot.lane.b32.xlu0 %v1502, 8
        %v1608 = vpop.permute.xlu0 %1607
        %1609 = vrot.lane.b32.xlu0 %v1509, 8
        %v1610 = vpop.permute.xlu0 %1609
        %1611 = vrot.lane.b32.xlu0 %v1516, 8
        %v1612 = vpop.permute.xlu0 %1611
        %1613 = vrot.lane.b32.xlu0 %v1523, 8
        %v1614 = vpop.permute.xlu0 %1613
        %1615 = vrot.lane.b32.xlu0 %v1530, 8
        %v1616 = vpop.permute.xlu0 %1615
        %1617 = vrot.lane.b32.xlu0 %v1537, 8
        %v1618 = vpop.permute.xlu0 %1617
        %1619 = vrot.lane.b32.xlu0 %v1544, 8
        %v1620 = vpop.permute.xlu0 %1619
        %1621 = vrot.lane.b32.xlu0 %v1551, 8
        %v1622 = vpop.permute.xlu0 %1621
        %1623 = vrot.lane.b32.xlu0 %v1558, 8
        %v1624 = vpop.permute.xlu0 %1623
        %1625 = vrot.lane.b32.xlu0 %v1565, 8
        %v1626 = vpop.permute.xlu0 %1625
        %1627 = vrot.lane.b32.xlu0 %v1572, 8
        %v1628 = vpop.permute.xlu0 %1627
        %1629 = vrot.lane.b32.xlu0 %v1579, 8
        %v1630 = vpop.permute.xlu0 %1629
        %1631 = vrot.lane.b32.xlu0 %v1586, 8
        %v1632 = vpop.permute.xlu0 %1631
        %1633 = vrot.lane.b32.xlu0 %v1593, 8
        %v1634 = vpop.permute.xlu0 %1633
        %1635 = vrot.lane.b32.xlu0 %v1600, 8
        %v1636 = vpop.permute.xlu0 %1635
        %v1639 = vsel %vm725, %v347, %v1386
        %v1642 = vsel %vm725, %v349, %v1388
        %v1645 = vsel %vm725, %v351, %v1390
        %v1648 = vsel %vm725, %v353, %v1392
        %v1651 = vsel %vm725, %v355, %v1394
        %v1654 = vsel %vm725, %v357, %v1396
        %v1657 = vsel %vm725, %v359, %v1398
        %v1660 = vsel %vm725, %v361, %v1400
        %v1663 = vsel %vm725, %v363, %v1402
        %v1666 = vsel %vm725, %v365, %v1404
        %v1669 = vsel %vm725, %v367, %v1406
        %v1672 = vsel %vm725, %v369, %v1408
        %v1675 = vsel %vm725, %v371, %v1410
        %v1678 = vsel %vm725, %v373, %v1412
        %v1681 = vsel %vm725, %v375, %v1414
        %v1684 = vsel %vm725, %v377, %v1416
        %v1687 = vsel %vm725, %v379, %v1418
        %v1690 = vsel %vm725, %v381, %v1420
        %v1692 = vsel %vm780, %v1639, %v1602
        %v1694 = vsel %vm780, %v1642, %v1604
        %v1696 = vsel %vm780, %v1645, %v1606
        %v1698 = vsel %vm780, %v1648, %v1608
        %v1700 = vsel %vm780, %v1651, %v1610
        %v1702 = vsel %vm780, %v1654, %v1612
        %v1704 = vsel %vm780, %v1657, %v1614
        %v1706 = vsel %vm780, %v1660, %v1616
        %v1708 = vsel %vm780, %v1663, %v1618
        %v1710 = vsel %vm780, %v1666, %v1620
        %v1712 = vsel %vm780, %v1669, %v1622
        %v1714 = vsel %vm780, %v1672, %v1624
        %v1716 = vsel %vm780, %v1675, %v1626
        %v1718 = vsel %vm780, %v1678, %v1628
        %v1720 = vsel %vm780, %v1681, %v1630
        %v1722 = vsel %vm780, %v1684, %v1632
        %v1724 = vsel %vm780, %v1687, %v1634
        %v1726 = vsel %vm780, %v1690, %v1636
        %v1727 = vld [vmem:[%s2] sm:$0xf]
        %v1728 = vld [vmem:[%s2 + $0x4] sm:$0x3]
        %v1729 = vld [vmem:[%s819] sm:$0xf]
        %v1730 = vld [vmem:[%s819 + $0x4] sm:$0x3]
        %v1747 = vunpack.c.l.b16 %v1694
        %v1748 = vunpack.c.l.b16 %v1696
        %v1749 = vunpack.c.l.b16 %v1698
        %v1750 = vunpack.c.l.b16 %v1700
        %v1751 = vunpack.c.l.b16 %v1702
        %v1752 = vunpack.c.l.b16 %v1704
        %v1753 = vunpack.c.l.b16 %v1706
        %v1754 = vunpack.c.l.b16 %v1708
        %v1755 = vunpack.c.l.b16 %v1710
        %v1756 = vunpack.c.l.b16 %v1712
        %v1757 = vunpack.c.l.b16 %v1714
        %v1758 = vunpack.c.l.b16 %v1716
        %v1759 = vunpack.c.l.b16 %v1718
        %v1760 = vunpack.c.l.b16 %v1720
        %v1761 = vunpack.c.l.b16 %v1722
        %v1762 = vunpack.c.l.b16 %v1724
        %v1763 = vpack.c.b16 %v1748, %v1747
        %v1764 = vpack.c.b16 %v1750, %v1749
        %v1765 = vpack.c.b16 %v1752, %v1751
        %v1766 = vpack.c.b16 %v1754, %v1753
        %v1767 = vpack.c.b16 %v1756, %v1755
        %v1768 = vpack.c.b16 %v1758, %v1757
        %v1769 = vpack.c.b16 %v1760, %v1759
        %v1770 = vpack.c.b16 %v1762, %v1761
        %v1773 = vunpack.c.l.b16 %v1729
        %v1774 = vunpack.c.l.b16 %v1730
        %v1775 = vpack.c.b16 %v1774, %v1773
        %v1777 = vsel %vm867, %v1763, 0
        %v1780 = vsel %vm867, %v1764, 0
        %v1783 = vsel %vm867, %v1765, 0
        %v1786 = vsel %vm867, %v1766, 0
        %v1789 = vsel %vm867, %v1767, 0
        %v1792 = vsel %vm867, %v1768, 0
        %v1795 = vsel %vm867, %v1769, 0
        %v1798 = vsel %vm867, %v1770, 0
        %v1801 = vsel %vm892, %v1775, 0
        %1803 = vmatprep.subr.bf16.mxu0 0
        %1804 = vmatpush1.bf16.msra.mxu0 %v1801
        %1805 = vmatprep.subr.bf16.mxu0 0
        %1806 = vmatpush1.bf16.msra.mxu0 0
        %1807 = vmatprep.subr.bf16.mxu0 0
        %1808 = vmatpush1.bf16.msra.mxu0 0
        %1809 = vmatprep.subr.bf16.mxu0 0
        %1810 = vmatpush1.bf16.msra.mxu0 0
        %1811 = vmatprep.subr.bf16.mxu0 0
        %1812 = vmatpush1.bf16.msra.mxu0 0
        %1813 = vmatprep.subr.bf16.mxu0 0
        %1814 = vmatpush1.bf16.msra.mxu0 0
        %1815 = vmatprep.subr.bf16.mxu0 0
        %1816 = vmatpush1.bf16.msra.mxu0 0
        %1817 = vmatprep.subr.bf16.mxu0 0
        %1818 = vmatpush1.bf16.msra.mxu0 0
        %1819 = vmatprep.subr.bf16.mxu0 0
        %1820 = vmatpush1.bf16.msra.mxu0 0
        %1821 = vmatprep.subr.bf16.mxu0 0
        %1822 = vmatpush1.bf16.msra.mxu0 0
        %1823 = vmatprep.subr.bf16.mxu0 0
        %1824 = vmatpush1.bf16.msra.mxu0 0
        %1825 = vmatprep.subr.bf16.mxu0 0
        %1826 = vmatpush1.bf16.msra.mxu0 0
        %1827 = vmatprep.subr.bf16.mxu0 0
        %1828 = vmatpush1.bf16.msra.mxu0 0
        %1829 = vmatprep.subr.bf16.mxu0 0
        %1830 = vmatpush1.bf16.msra.mxu0 0
        %1831 = vmatprep.subr.bf16.mxu0 0
        %1832 = vmatpush1.bf16.msra.mxu0 0
        %1833 = vmatprep.subr.bf16.mxu0 0
        %1834 = vmatpush1.bf16.msra.mxu0 0
        %1835 = vmatprep.mubr.bf16.mxu0 0
        %1836 = vmatmul.mubr.bf16.gmra.mrb[0].mxu0 %v1777
        %v1837 = vpop.f32.mrb[0].mxu0
        %v1838 = vadd.f32 0.0, %v1837
        %v1839 = vpop.f32.mrb[0].mxu0
        %v1840 = vpop.f32.mrb[0].mxu0
        %v1841 = vadd.f32 0.0, %v1840
        %v1842 = vpop.f32.mrb[0].mxu0
        %1843 = vmatprep.mubr.bf16.mxu0 0
        %1844 = vmatmul.mubr.bf16.gmra.mrb[0].mxu0 %v1780
        %v1845 = vpop.f32.mrb[0].mxu0
        %v1846 = vadd.f32 0.0, %v1845
        %v1847 = vpop.f32.mrb[0].mxu0
        %v1848 = vpop.f32.mrb[0].mxu0
        %v1849 = vadd.f32 0.0, %v1848
        %v1850 = vpop.f32.mrb[0].mxu0
        %1851 = vmatprep.mubr.bf16.mxu0 0
        %1852 = vmatmul.mubr.bf16.gmra.mrb[0].mxu0 %v1783
        %v1853 = vpop.f32.mrb[0].mxu0
        %v1854 = vadd.f32 0.0, %v1853
        %v1855 = vpop.f32.mrb[0].mxu0
        %v1856 = vpop.f32.mrb[0].mxu0
        %v1857 = vadd.f32 0.0, %v1856
        %v1858 = vpop.f32.mrb[0].mxu0
        %1859 = vmatprep.mubr.bf16.mxu0 0
        %1860 = vmatmul.mubr.bf16.gmra.mrb[0].mxu0 %v1786
        %v1861 = vpop.f32.mrb[0].mxu0
        %v1862 = vadd.f32 0.0, %v1861
        %v1863 = vpop.f32.mrb[0].mxu0
        %v1864 = vpop.f32.mrb[0].mxu0
        %v1865 = vadd.f32 0.0, %v1864
        %v1866 = vpop.f32.mrb[0].mxu0
        %1867 = vmatprep.mubr.bf16.mxu0 0
        %1868 = vmatmul.mubr.bf16.gmra.mrb[0].mxu0 %v1789
        %v1869 = vpop.f32.mrb[0].mxu0
        %v1870 = vadd.f32 0.0, %v1869
        %v1871 = vpop.f32.mrb[0].mxu0
        %v1872 = vpop.f32.mrb[0].mxu0
        %v1873 = vadd.f32 0.0, %v1872
        %v1874 = vpop.f32.mrb[0].mxu0
        %1875 = vmatprep.mubr.bf16.mxu0 0
        %1876 = vmatmul.mubr.bf16.gmra.mrb[0].mxu0 %v1792
        %v1877 = vpop.f32.mrb[0].mxu0
        %v1878 = vadd.f32 0.0, %v1877
        %v1879 = vpop.f32.mrb[0].mxu0
        %v1880 = vpop.f32.mrb[0].mxu0
        %v1881 = vadd.f32 0.0, %v1880
        %v1882 = vpop.f32.mrb[0].mxu0
        %1883 = vmatprep.mubr.bf16.mxu0 0
        %1884 = vmatmul.mubr.bf16.gmra.mrb[0].mxu0 %v1795
        %v1885 = vpop.f32.mrb[0].mxu0
        %v1886 = vadd.f32 0.0, %v1885
        %v1887 = vpop.f32.mrb[0].mxu0
        %v1888 = vpop.f32.mrb[0].mxu0
        %v1889 = vadd.f32 0.0, %v1888
        %v1890 = vpop.f32.mrb[0].mxu0
        %1891 = vmatprep.mubr.bf16.mxu0 0
        %1892 = vmatmul.mubr.bf16.gmra.mrb[0].mxu0 %v1798
        %v1893 = vpop.f32.mrb[0].mxu0
        %v1894 = vadd.f32 0.0, %v1893
        %v1895 = vpop.f32.mrb[0].mxu0
        %v1896 = vpop.f32.mrb[0].mxu0
        %v1897 = vadd.f32 0.0, %v1896
        %v1898 = vpop.f32.mrb[0].mxu0
        %1899 = vdwg.mxu0
        %v1901 = vunpack.c.l.b16 %v1692
        %v1902 = vpack.c.b16 %v1747, %v1901
        %v1903 = vpack.c.b16 %v1749, %v1748
        %v1904 = vpack.c.b16 %v1751, %v1750
        %v1905 = vpack.c.b16 %v1753, %v1752
        %v1906 = vpack.c.b16 %v1755, %v1754
        %v1907 = vpack.c.b16 %v1757, %v1756
        %v1908 = vpack.c.b16 %v1759, %v1758
        %v1909 = vpack.c.b16 %v1761, %v1760
        %v1912 = vunpack.c.l.b16 %v1727
        %v1913 = vunpack.c.l.b16 %v1728
        %v1914 = vpack.c.b16 %v1913, %v1912
        %v1916 = vsel %vm867, %v1902, 0
        %v1919 = vsel %vm867, %v1903, 0
        %v1922 = vsel %vm867, %v1904, 0
        %v1925 = vsel %vm867, %v1905, 0
        %v1928 = vsel %vm867, %v1906, 0
        %v1931 = vsel %vm867, %v1907, 0
        %v1934 = vsel %vm867, %v1908, 0
        %v1937 = vsel %vm867, %v1909, 0
        %v1940 = vsel %vm892, %v1914, 0
        %1942 = vmatprep.subr.bf16.mxu0 0
        %1943 = vmatpush1.bf16.msra.mxu0 %v1940
        %1944 = vmatprep.subr.bf16.mxu0 0
        %1945 = vmatpush1.bf16.msra.mxu0 0
        %1946 = vmatprep.subr.bf16.mxu0 0
        %1947 = vmatpush1.bf16.msra.mxu0 0
        %1948 = vmatprep.subr.bf16.mxu0 0
        %1949 = vmatpush1.bf16.msra.mxu0 0
        %1950 = vmatprep.subr.bf16.mxu0 0
        %1951 = vmatpush1.bf16.msra.mxu0 0
        %1952 = vmatprep.subr.bf16.mxu0 0
        %1953 = vmatpush1.bf16.msra.mxu0 0
        %1954 = vmatprep.subr.bf16.mxu0 0
        %1955 = vmatpush1.bf16.msra.mxu0 0
        %1956 = vmatprep.subr.bf16.mxu0 0
        %1957 = vmatpush1.bf16.msra.mxu0 0
        %1958 = vmatprep.subr.bf16.mxu0 0
        %1959 = vmatpush1.bf16.msra.mxu0 0
        %1960 = vmatprep.subr.bf16.mxu0 0
        %1961 = vmatpush1.bf16.msra.mxu0 0
        %1962 = vmatprep.subr.bf16.mxu0 0
        %1963 = vmatpush1.bf16.msra.mxu0 0
        %1964 = vmatprep.subr.bf16.mxu0 0
        %1965 = vmatpush1.bf16.msra.mxu0 0
        %1966 = vmatprep.subr.bf16.mxu0 0
        %1967 = vmatpush1.bf16.msra.mxu0 0
        %1968 = vmatprep.subr.bf16.mxu0 0
        %1969 = vmatpush1.bf16.msra.mxu0 0
        %1970 = vmatprep.subr.bf16.mxu0 0
        %1971 = vmatpush1.bf16.msra.mxu0 0
        %1972 = vmatprep.subr.bf16.mxu0 0
        %1973 = vmatpush1.bf16.msra.mxu0 0
        %1974 = vmatprep.mubr.bf16.mxu0 0
        %1975 = vmatmul.mubr.bf16.gmra.mrb[0].mxu0 %v1916
        %v1976 = vpop.f32.mrb[0].mxu0
        %v1977 = vadd.f32 %v1838, %v1976
        %v1978 = vpop.f32.mrb[0].mxu0
        %v1979 = vpop.f32.mrb[0].mxu0
        %v1980 = vadd.f32 %v1841, %v1979
        %v1981 = vpop.f32.mrb[0].mxu0
        %1982 = vmatprep.mubr.bf16.mxu0 0
        %1983 = vmatmul.mubr.bf16.gmra.mrb[0].mxu0 %v1919
        %v1984 = vpop.f32.mrb[0].mxu0
        %v1985 = vadd.f32 %v1846, %v1984
        %v1986 = vpop.f32.mrb[0].mxu0
        %v1987 = vpop.f32.mrb[0].mxu0
        %v1988 = vadd.f32 %v1849, %v1987
        %v1989 = vpop.f32.mrb[0].mxu0
        %1990 = vmatprep.mubr.bf16.mxu0 0
        %1991 = vmatmul.mubr.bf16.gmra.mrb[0].mxu0 %v1922
        %v1992 = vpop.f32.mrb[0].mxu0
        %v1993 = vadd.f32 %v1854, %v1992
        %v1994 = vpop.f32.mrb[0].mxu0
        %v1995 = vpop.f32.mrb[0].mxu0
        %v1996 = vadd.f32 %v1857, %v1995
        %v1997 = vpop.f32.mrb[0].mxu0
        %1998 = vmatprep.mubr.bf16.mxu0 0
        %1999 = vmatmul.mubr.bf16.gmra.mrb[0].mxu0 %v1925
        %v2000 = vpop.f32.mrb[0].mxu0
        %v2001 = vadd.f32 %v1862, %v2000
        %v2002 = vpop.f32.mrb[0].mxu0
        %v2003 = vpop.f32.mrb[0].mxu0
        %v2004 = vadd.f32 %v1865, %v2003
        %v2005 = vpop.f32.mrb[0].mxu0
        %2006 = vmatprep.mubr.bf16.mxu0 0
        %2007 = vmatmul.mubr.bf16.gmra.mrb[0].mxu0 %v1928
        %v2008 = vpop.f32.mrb[0].mxu0
        %v2009 = vadd.f32 %v1870, %v2008
        %v2010 = vpop.f32.mrb[0].mxu0
        %v2011 = vpop.f32.mrb[0].mxu0
        %v2012 = vadd.f32 %v1873, %v2011
        %v2013 = vpop.f32.mrb[0].mxu0
        %2014 = vmatprep.mubr.bf16.mxu0 0
        %2015 = vmatmul.mubr.bf16.gmra.mrb[0].mxu0 %v1931
        %v2016 = vpop.f32.mrb[0].mxu0
        %v2017 = vadd.f32 %v1878, %v2016
        %v2018 = vpop.f32.mrb[0].mxu0
        %v2019 = vpop.f32.mrb[0].mxu0
        %v2020 = vadd.f32 %v1881, %v2019
        %v2021 = vpop.f32.mrb[0].mxu0
        %2022 = vmatprep.mubr.bf16.mxu0 0
        %2023 = vmatmul.mubr.bf16.gmra.mrb[0].mxu0 %v1934
        %v2024 = vpop.f32.mrb[0].mxu0
        %v2025 = vadd.f32 %v1886, %v2024
        %v2026 = vpop.f32.mrb[0].mxu0
        %v2027 = vpop.f32.mrb[0].mxu0
        %v2028 = vadd.f32 %v1889, %v2027
        %v2029 = vpop.f32.mrb[0].mxu0
        %2030 = vmatprep.mubr.bf16.mxu0 0
        %2031 = vmatmul.mubr.bf16.gmra.mrb[0].mxu0 %v1937
        %v2032 = vpop.f32.mrb[0].mxu0
        %v2033 = vadd.f32 %v1894, %v2032
        %v2034 = vpop.f32.mrb[0].mxu0
        %v2035 = vpop.f32.mrb[0].mxu0
        %v2036 = vadd.f32 %v1897, %v2035
        %v2037 = vpop.f32.mrb[0].mxu0
        %2038 = vdwg.mxu0
        %v2039 = vld [vmem:[%s1132] sm:$0xf]
        %v2040 = vld [vmem:[%s1132 + $0x4] sm:$0x3]
        %v2042 = vunpack.c.l.b16 %v1726
        %v2043 = vpack.c.b16 %v2042, %v1762
        %v2046 = vunpack.c.l.b16 %v2039
        %v2047 = vunpack.c.l.b16 %v2040
        %v2048 = vpack.c.b16 %v2047, %v2046
        %v2050 = vsel %vm867, %v2043, 0
        %v2053 = vsel %vm892, %v2048, 0
        %2055 = vmatprep.subr.bf16.mxu0 0
        %2056 = vmatpush1.bf16.msra.mxu0 %v2053
        %2057 = vmatprep.subr.bf16.mxu0 0
        %2058 = vmatpush1.bf16.msra.mxu0 0
        %2059 = vmatprep.subr.bf16.mxu0 0
        %2060 = vmatpush1.bf16.msra.mxu0 0
        %2061 = vmatprep.subr.bf16.mxu0 0
        %2062 = vmatpush1.bf16.msra.mxu0 0
        %2063 = vmatprep.subr.bf16.mxu0 0
        %2064 = vmatpush1.bf16.msra.mxu0 0
        %2065 = vmatprep.subr.bf16.mxu0 0
        %2066 = vmatpush1.bf16.msra.mxu0 0
        %2067 = vmatprep.subr.bf16.mxu0 0
        %2068 = vmatpush1.bf16.msra.mxu0 0
        %2069 = vmatprep.subr.bf16.mxu0 0
        %2070 = vmatpush1.bf16.msra.mxu0 0
        %2071 = vmatprep.subr.bf16.mxu0 0
        %2072 = vmatpush1.bf16.msra.mxu0 0
        %2073 = vmatprep.subr.bf16.mxu0 0
        %2074 = vmatpush1.bf16.msra.mxu0 0
        %2075 = vmatprep.subr.bf16.mxu0 0
        %2076 = vmatpush1.bf16.msra.mxu0 0
        %2077 = vmatprep.subr.bf16.mxu0 0
        %2078 = vmatpush1.bf16.msra.mxu0 0
        %2079 = vmatprep.subr.bf16.mxu0 0
        %2080 = vmatpush1.bf16.msra.mxu0 0
        %2081 = vmatprep.subr.bf16.mxu0 0
        %2082 = vmatpush1.bf16.msra.mxu0 0
        %2083 = vmatprep.subr.bf16.mxu0 0
        %2084 = vmatpush1.bf16.msra.mxu0 0
        %2085 = vmatprep.subr.bf16.mxu0 0
        %2086 = vmatpush1.bf16.msra.mxu0 0
        %2087 = vmatprep.mubr.bf16.mxu0 0
        %2088 = vmatmul.mubr.bf16.gmra.mrb[0].mxu0 %v1919
        %v2089 = vpop.f32.mrb[0].mxu0
        %v2090 = vadd.f32 0.0, %v2089
        %v2091 = vpop.f32.mrb[0].mxu0
        %v2092 = vpop.f32.mrb[0].mxu0
        %v2093 = vadd.f32 0.0, %v2092
        %v2094 = vpop.f32.mrb[0].mxu0
        %2095 = vmatprep.mubr.bf16.mxu0 0
        %2096 = vmatmul.mubr.bf16.gmra.mrb[0].mxu0 %v1922
        %v2097 = vpop.f32.mrb[0].mxu0
        %v2098 = vadd.f32 0.0, %v2097
        %v2099 = vpop.f32.mrb[0].mxu0
        %v2100 = vpop.f32.mrb[0].mxu0
        %v2101 = vadd.f32 0.0, %v2100
        %v2102 = vpop.f32.mrb[0].mxu0
        %2103 = vmatprep.mubr.bf16.mxu0 0
        %2104 = vmatmul.mubr.bf16.gmra.mrb[0].mxu0 %v1925
        %v2105 = vpop.f32.mrb[0].mxu0
        %v2106 = vadd.f32 0.0, %v2105
        %v2107 = vpop.f32.mrb[0].mxu0
        %v2108 = vpop.f32.mrb[0].mxu0
        %v2109 = vadd.f32 0.0, %v2108
        %v2110 = vpop.f32.mrb[0].mxu0
        %2111 = vmatprep.mubr.bf16.mxu0 0
        %2112 = vmatmul.mubr.bf16.gmra.mrb[0].mxu0 %v1928
        %v2113 = vpop.f32.mrb[0].mxu0
        %v2114 = vadd.f32 0.0, %v2113
        %v2115 = vpop.f32.mrb[0].mxu0
        %v2116 = vpop.f32.mrb[0].mxu0
        %v2117 = vadd.f32 0.0, %v2116
        %v2118 = vpop.f32.mrb[0].mxu0
        %2119 = vmatprep.mubr.bf16.mxu0 0
        %2120 = vmatmul.mubr.bf16.gmra.mrb[0].mxu0 %v1931
        %v2121 = vpop.f32.mrb[0].mxu0
        %v2122 = vadd.f32 0.0, %v2121
        %v2123 = vpop.f32.mrb[0].mxu0
        %v2124 = vpop.f32.mrb[0].mxu0
        %v2125 = vadd.f32 0.0, %v2124
        %v2126 = vpop.f32.mrb[0].mxu0
        %2127 = vmatprep.mubr.bf16.mxu0 0
        %2128 = vmatmul.mubr.bf16.gmra.mrb[0].mxu0 %v1934
        %v2129 = vpop.f32.mrb[0].mxu0
        %v2130 = vadd.f32 0.0, %v2129
        %v2131 = vpop.f32.mrb[0].mxu0
        %v2132 = vpop.f32.mrb[0].mxu0
        %v2133 = vadd.f32 0.0, %v2132
        %v2134 = vpop.f32.mrb[0].mxu0
        %2135 = vmatprep.mubr.bf16.mxu0 0
        %2136 = vmatmul.mubr.bf16.gmra.mrb[0].mxu0 %v1937
        %v2137 = vpop.f32.mrb[0].mxu0
        %v2138 = vadd.f32 0.0, %v2137
        %v2139 = vpop.f32.mrb[0].mxu0
        %v2140 = vpop.f32.mrb[0].mxu0
        %v2141 = vadd.f32 0.0, %v2140
        %v2142 = vpop.f32.mrb[0].mxu0
        %2143 = vmatprep.mubr.bf16.mxu0 0
        %2144 = vmatmul.mubr.bf16.gmra.mrb[0].mxu0 %v2050
        %v2145 = vpop.f32.mrb[0].mxu0
        %v2146 = vadd.f32 0.0, %v2145
        %v2147 = vpop.f32.mrb[0].mxu0
        %v2148 = vpop.f32.mrb[0].mxu0
        %v2149 = vadd.f32 0.0, %v2148
        %v2150 = vpop.f32.mrb[0].mxu0
        %2151 = vdwg.mxu0
        %v2152 = vadd.f32 %v1977, %v2090
        %v2153 = vadd.f32 %v1980, %v2093
        %v2154 = vadd.f32 %v1985, %v2098
        %v2155 = vadd.f32 %v1988, %v2101
        %v2156 = vadd.f32 %v1993, %v2106
        %v2157 = vadd.f32 %v1996, %v2109
        %v2158 = vadd.f32 %v2001, %v2114
        %v2159 = vadd.f32 %v2004, %v2117
        %v2160 = vadd.f32 %v2009, %v2122
        %v2161 = vadd.f32 %v2012, %v2125
        %v2162 = vadd.f32 %v2017, %v2130
        %v2163 = vadd.f32 %v2020, %v2133
        %v2164 = vadd.f32 %v2025, %v2138
        %v2165 = vadd.f32 %v2028, %v2141
        %v2166 = vadd.f32 %v2033, %v2146
        %v2167 = vadd.f32 %v2036, %v2149
        %v2168 = vpack.c.bf16 %v2152, %v2152
        %v2169 = vpack.c.bf16 %v2153, %v2153
        %v2170 = vpack.c.bf16 %v2154, %v2154
        %v2171 = vpack.c.bf16 %v2155, %v2155
        %v2172 = vpack.c.bf16 %v2156, %v2156
        %v2173 = vpack.c.bf16 %v2157, %v2157
        %v2174 = vpack.c.bf16 %v2158, %v2158
        %v2175 = vpack.c.bf16 %v2159, %v2159
        %v2176 = vpack.c.bf16 %v2160, %v2160
        %v2177 = vpack.c.bf16 %v2161, %v2161
        %v2178 = vpack.c.bf16 %v2162, %v2162
        %v2179 = vpack.c.bf16 %v2163, %v2163
        %v2180 = vpack.c.bf16 %v2164, %v2164
        %v2181 = vpack.c.bf16 %v2165, %v2165
        %v2182 = vpack.c.bf16 %v2166, %v2166
        %v2183 = vpack.c.bf16 %v2167, %v2167
        %2184 = vst.msk [vmem:[%s302] sm:$0xf] %vm1278, %v2168
        %2185 = vst.msk [vmem:[%s302 + $0x4] sm:$0xf] %vm1278, %v2169
        %2186 = vst.msk [vmem:[%s302 + $0x8] sm:$0xf] %vm1278, %v2170
        %2187 = vst.msk [vmem:[%s302 + $0xc] sm:$0xf] %vm1278, %v2171
        %2188 = vst.msk [vmem:[%s302 + $0x10] sm:$0xf] %vm1278, %v2172
        %2189 = vst.msk [vmem:[%s302 + $0x14] sm:$0xf] %vm1278, %v2173
        %2190 = vst.msk [vmem:[%s302 + $0x18] sm:$0xf] %vm1278, %v2174
        %2191 = vst.msk [vmem:[%s302 + $0x1c] sm:$0xf] %vm1278, %v2175
        %2192 = vst.msk [vmem:[%s302 + $0x20] sm:$0xf] %vm1278, %v2176
        %2193 = vst.msk [vmem:[%s302 + $0x24] sm:$0xf] %vm1278, %v2177
        %2194 = vst.msk [vmem:[%s302 + $0x28] sm:$0xf] %vm1278, %v2178
        %2195 = vst.msk [vmem:[%s302 + $0x2c] sm:$0xf] %vm1278, %v2179
        %2196 = vst.msk [vmem:[%s302 + $0x30] sm:$0xf] %vm1278, %v2180
        %2197 = vst.msk [vmem:[%s302 + $0x34] sm:$0xf] %vm1278, %v2181
        %2198 = vst.msk [vmem:[%s302 + $0x38] sm:$0xf] %vm1278, %v2182
        %2199 = vst.msk [vmem:[%s302 + $0x3c] sm:$0xf] %vm1278, %v2183
        %v2200 = vsel %vm780, %v2152, 0.0
        %v2201 = vsel %vm780, %v2153, 0.0
        %v2202 = vadd.f32 %v2200, %v2201
        %v2203 = vsel %vm780, %v2154, 0.0
        %v2204 = vadd.f32 %v2202, %v2203
        %v2205 = vsel %vm780, %v2155, 0.0
        %v2206 = vadd.f32 %v2204, %v2205
        %v2207 = vsel %vm780, %v2156, 0.0
        %v2208 = vadd.f32 %v2206, %v2207
        %v2209 = vsel %vm780, %v2157, 0.0
        %v2210 = vadd.f32 %v2208, %v2209
        %v2211 = vsel %vm780, %v2158, 0.0
        %v2212 = vadd.f32 %v2210, %v2211
        %v2213 = vsel %vm780, %v2159, 0.0
        %v2214 = vadd.f32 %v2212, %v2213
        %v2215 = vsel %vm780, %v2160, 0.0
        %v2216 = vadd.f32 %v2214, %v2215
        %v2217 = vsel %vm780, %v2161, 0.0
        %v2218 = vadd.f32 %v2216, %v2217
        %v2219 = vsel %vm780, %v2162, 0.0
        %v2220 = vadd.f32 %v2218, %v2219
        %v2221 = vsel %vm780, %v2163, 0.0
        %v2222 = vadd.f32 %v2220, %v2221
        %v2223 = vsel %vm780, %v2164, 0.0
        %v2224 = vadd.f32 %v2222, %v2223
        %v2225 = vsel %vm780, %v2165, 0.0
        %v2226 = vadd.f32 %v2224, %v2225
        %v2227 = vsel %vm780, %v2166, 0.0
        %v2228 = vadd.f32 %v2226, %v2227
        %v2229 = vsel %vm780, %v2167, 0.0
        %v2230 = vadd.f32 %v2228, %v2229
        %v2231 = vrot.slane %v2230, 4
        %v2232 = vadd.f32 %v2230, %v2231
        %v2233 = vrot.slane %v2232, 2
        %v2234 = vadd.f32 %v2232, %v2233
        %v2235 = vrot.slane %v2234, 1
        %v2236 = vadd.f32 %v2234, %v2235
        %v2237 = vmul.f32 %v2152, %v2152
        %v2238 = vmul.f32 %v2153, %v2153
        %v2239 = vmul.f32 %v2154, %v2154
        %v2240 = vmul.f32 %v2155, %v2155
        %v2241 = vmul.f32 %v2156, %v2156
        %v2242 = vmul.f32 %v2157, %v2157
        %v2243 = vmul.f32 %v2158, %v2158
        %v2244 = vmul.f32 %v2159, %v2159
        %v2245 = vmul.f32 %v2160, %v2160
        %v2246 = vmul.f32 %v2161, %v2161
        %v2247 = vmul.f32 %v2162, %v2162
        %v2248 = vmul.f32 %v2163, %v2163
        %v2249 = vmul.f32 %v2164, %v2164
        %v2250 = vmul.f32 %v2165, %v2165
        %v2251 = vmul.f32 %v2166, %v2166
        %v2252 = vmul.f32 %v2167, %v2167
        %v2253 = vsel %vm780, %v2237, 0.0
        %v2254 = vsel %vm780, %v2238, 0.0
        %v2255 = vadd.f32 %v2253, %v2254
        %v2256 = vsel %vm780, %v2239, 0.0
        %v2257 = vadd.f32 %v2255, %v2256
        %v2258 = vsel %vm780, %v2240, 0.0
        %v2259 = vadd.f32 %v2257, %v2258
        %v2260 = vsel %vm780, %v2241, 0.0
        %v2261 = vadd.f32 %v2259, %v2260
        %v2262 = vsel %vm780, %v2242, 0.0
        %v2263 = vadd.f32 %v2261, %v2262
        %v2264 = vsel %vm780, %v2243, 0.0
        %v2265 = vadd.f32 %v2263, %v2264
        %v2266 = vsel %vm780, %v2244, 0.0
        %v2267 = vadd.f32 %v2265, %v2266
        %v2268 = vsel %vm780, %v2245, 0.0
        %v2269 = vadd.f32 %v2267, %v2268
        %v2270 = vsel %vm780, %v2246, 0.0
        %v2271 = vadd.f32 %v2269, %v2270
        %v2272 = vsel %vm780, %v2247, 0.0
        %v2273 = vadd.f32 %v2271, %v2272
        %v2274 = vsel %vm780, %v2248, 0.0
        %v2275 = vadd.f32 %v2273, %v2274
        %v2276 = vsel %vm780, %v2249, 0.0
        %v2277 = vadd.f32 %v2275, %v2276
        %v2278 = vsel %vm780, %v2250, 0.0
        %v2279 = vadd.f32 %v2277, %v2278
        %v2280 = vsel %vm780, %v2251, 0.0
        %v2281 = vadd.f32 %v2279, %v2280
        %v2282 = vsel %vm780, %v2252, 0.0
        %v2283 = vadd.f32 %v2281, %v2282
        %v2284 = vrot.slane %v2283, 4
        %v2285 = vadd.f32 %v2283, %v2284
        %v2286 = vrot.slane %v2285, 2
        %v2287 = vadd.f32 %v2285, %v2286
        %v2288 = vrot.slane %v2287, 1
        %v2289 = vadd.f32 %v2287, %v2288
        %v2290 = vadd.f32 %v1331, %v2236
        %v2291 = vadd.f32 %v1384, %v2289
        %vm2292 = vcmask 1040384
        %v2293 = vsel %vm2292, %v2290, %v2291
        %vm2294 = vcmask 1041408
        %v2295 = vsel %vm2294, %v2293, 0.0
        %2296 = vst.msk [vmem:[%s273] sm:$0xff] %vm780, %v2295
        %s2297 = smul.u32 16, %s25
        %p2298 = scmp.lt.s32.totalorder %s24, 1
        %s2299 = scalar_select %p2298, %s24, 1
        %p2300 = scmp.lt.s32.totalorder %s2297, 15
        %s2301 = scalar_select %p2300, %s2297, 15
        %s2302 = smul.addr %s2299, 16
        %s2303 = sadd.s32 %s2301, %s2302
        %s2304 = smul.addr %s2303, 4
        %s2305 = scalar_lea.vmem %s3, %s2304
        %s2306 = smul.u32 16, %s25
        %p2307 = scmp.lt.s32.totalorder %s24, 1
        %s2308 = scalar_select %p2307, %s24, 1
        %p2309 = scmp.lt.s32.totalorder %s2306, 15
        %s2310 = scalar_select %p2309, %s2306, 15
        %s2311 = smul.addr %s2308, 16
        %s2312 = sadd.s32 %s2310, %s2311
        %s2313 = smul.addr %s2312, 4
        %s2314 = scalar_lea.vmem %s4, %s2313
        %s2315 = sand.u32 %s171, 1
        %s2316 = scalar_lea.sflag [#allocation3], %s2315
        %s2317 = sand.u32 %s171, 1
        %s2318 = smul.addr %s2317, 8
        %s2319 = scalar_lea.vmem [#allocation2], %s2318
        // Predicated region
        $region33: #{tpu_custom_call.1} parent=31 // pred_check
          %p2320 = pneg %p125
        $region34: #{tpu_custom_call.1} parent=31 // pred_check_branch
          %2322 = sbr.rel (%p2320) target = $region36
        $region35: #{tpu_custom_call.1} parent=31 // pred_region
          %s2323 = smul.u32 16, %s25
        $region36: #{tpu_custom_call.1} parent=31 // pred_fallthru
          _
        // Predicated region
        $region37: #{tpu_custom_call.1} parent=31 // pred_check
          %p2324 = pneg %p153
        $region38: #{tpu_custom_call.1} parent=31 // pred_check_branch
          %2326 = sbr.rel (%p2324) target = $region40
        $region39: #{tpu_custom_call.1} parent=31 // pred_region
          %s2327 = smul.u32 16, %s25
        $region40: #{tpu_custom_call.1} parent=31 // pred_fallthru
          _
        // Predicated region
        $region41: #{tpu_custom_call.1} parent=31 // pred_check
          %p2328 = pneg %p181
        $region42: #{tpu_custom_call.1} parent=31 // pred_check_branch
          %2330 = sbr.rel (%p2328) target = $region44
        $region43: #{tpu_custom_call.1} parent=31 // pred_region
          %s2332 = ssub.s32 128, 128
          %2333 = vsyncadd %s2316, %s2332
          %s2334 = sadd.s32 %s25, %s24
          %s2335 = smul.addr %s2334, 128
          %s2336 = scalar_lea.hbm %s5, %s2335
          %s2338 = sshll.u32 %s2319, 4
          %s2339 = int_to_ptr.vmem [resolvable:$true] %s2338
          %2341 = dma.vmem_to_hbm [thread:$0]  %s2339, 128, %s2336, %s2316
        $region44: #{tpu_custom_call.1} parent=31 // pred_fallthru
          _
      $region32: #{tpu_custom_call.1} parent=5 // pred_fallthru
        _
      %p2342 = scmp.le.s32.totalorder 2, %s15
      // Predicated region
      $region45: #{tpu_custom_call.1} parent=5 // pred_check
        %p2343 = pneg %p2342
      $region46: #{tpu_custom_call.1} parent=5 // pred_check_branch
        %2345 = sbr.rel (%p2343) target = $region48
      $region47: #{tpu_custom_call.1} parent=5 // pred_region
        %s2346 = ssub.s32 %s15, 2
        // Predicated region
        $region49: #{tpu_custom_call.1} parent=47 // pred_check
          %p2347 = pneg %p131
        $region50: #{tpu_custom_call.1} parent=47 // pred_check_branch
          %2349 = sbr.rel (%p2347) target = $region52
        $region51: #{tpu_custom_call.1} parent=47 // pred_region
          %s2350 = smul.u32 16, %s27
          %p2351 = scmp.lt.s32.totalorder %s26, 1
          %s2352 = scalar_select %p2351, %s26, 1
          %p2353 = scmp.lt.s32.totalorder %s2350, 15
          %s2354 = scalar_select %p2353, %s2350, 15
          %s2355 = smul.addr %s2352, 16
          %s2356 = sadd.s32 %s2354, %s2355
          %s2357 = smul.addr %s2356, 4
          %s2358 = scalar_lea.vmem %s3, %s2357
        $region52: #{tpu_custom_call.1} parent=47 // pred_fallthru
          _
        // Predicated region
        $region53: #{tpu_custom_call.1} parent=47 // pred_check
          %p2359 = pneg %p159
        $region54: #{tpu_custom_call.1} parent=47 // pred_check_branch
          %2361 = sbr.rel (%p2359) target = $region56
        $region55: #{tpu_custom_call.1} parent=47 // pred_region
          %s2362 = smul.u32 16, %s27
          %p2363 = scmp.lt.s32.totalorder %s26, 1
          %s2364 = scalar_select %p2363, %s26, 1
          %p2365 = scmp.lt.s32.totalorder %s2362, 15
          %s2366 = scalar_select %p2365, %s2362, 15
          %s2367 = smul.addr %s2364, 16
          %s2368 = sadd.s32 %s2366, %s2367
          %s2369 = smul.addr %s2368, 4
          %s2370 = scalar_lea.vmem %s4, %s2369
        $region56: #{tpu_custom_call.1} parent=47 // pred_fallthru
          _
        // Predicated region
        $region57: #{tpu_custom_call.1} parent=47 // pred_check
          %p2371 = pneg %p187
        $region58: #{tpu_custom_call.1} parent=47 // pred_check_branch
          %2373 = sbr.rel (%p2371) target = $region60
        $region59: #{tpu_custom_call.1} parent=47 // pred_region
          %s2374 = sand.u32 %s172, 1
          %s2375 = scalar_lea.sflag [#allocation3], %s2374
          %s2376 = sand.u32 %s172, 1
          %s2377 = smul.addr %s2376, 8
          %s2378 = scalar_lea.vmem [#allocation2], %s2377
          %2379 = dma.done %s2375, 128
        $region60: #{tpu_custom_call.1} parent=47 // pred_fallthru
          _
      $region48: #{tpu_custom_call.1} parent=5 // pred_fallthru
        _
    $region6: #{tpu_custom_call.1} parent=1 // loop_footer
      %s19 = sadd.s32 1, %s15
    $region7: #{tpu_custom_call.1} parent=1 // loop_footer_branch
      %14 = sbr.rel target = $region3
    $region8: #{tpu_custom_call.1} parent=1 // loop_exit
      _
    %2380 = vsyncpa [#allocation3], 1
    %s2381 = scalar_lea.sflag [#allocation3], 1
    %2382 = vsyncpa %s2381, 1

</llo_original>
